<compile_context>
chip_gen: v6e
topology: v6e:2x2x1
jax: 0.10.0
libtpu: 0.0.40
codegen_flags: <defaults>
</compile_context>

<pallas_src>
import jax
import jax.numpy as jnp
from jax import lax
from jax.experimental import pallas as pl
from jax.experimental.pallas import tpu as pltpu

# ---- model hyper-parameters (small, consistent with the module) ------------
B = 2                        # batch
N = 8                        # sequence length (tokens)
C = 32                       # embedding dim
NUM_HEADS = 4
HEAD_DIM = C // NUM_HEADS
SCALE = HEAD_DIM ** (-0.5)   # qk_scale=None -> head_dim**-0.5
MLP_HIDDEN = int(C * 4.0)    # mlp_ratio = 4.0 -> 128
LN_EPS = 1e-5                # torch.nn.LayerNorm default
M = B * N                    # folded matmul M dimension


def _layernorm(x, gamma, beta):
    mu = jnp.mean(x, axis=-1, keepdims=True)
    var = jnp.mean(jnp.square(x - mu), axis=-1, keepdims=True)
    return (x - mu) * lax.rsqrt(var + LN_EPS) * gamma + beta


def block_kernel(x_ref, vec_ref, bf1_ref, wattn_ref, wmlp_ref, o_ref):
    x = x_ref[...]                                   # (M, C) f32, M = B*N

    # vec slab rows: [g1, b1, bp, g2, b2, bf2]  (each (1, C) view, no lane work)
    g1, b1 = vec_ref[0:1, :], vec_ref[1:2, :]
    bp = vec_ref[2:3, :]
    g2, b2 = vec_ref[3:4, :], vec_ref[4:5, :]
    bf2 = vec_ref[5:6, :]
    bf1 = bf1_ref[...]                               # (1, MLP_HIDDEN)

    # ---------------- norm1 + multi-head attention + residual ---------------
    xn = _layernorm(x, g1, b1)                       # (M, C)

    # Per-head projections: weights are pre-laid-out as (H, C, hd), so each
    # projection is ONE batched-over-heads dot_general (no head slicing).
    xn_h = jnp.broadcast_to(xn, (NUM_HEADS, M, C))   # hoisted once, reused 3x
    q = jnp.einsum('hmc,hcd->hmd', xn_h, wattn_ref[0],
                   preferred_element_type=jnp.float32)   # SCALE folded into Wq
    k = jnp.einsum('hmc,hcd->hmd', xn_h, wattn_ref[1],
                   preferred_element_type=jnp.float32)
    v = jnp.einsum('hmc,hcd->hmd', xn_h, wattn_ref[2],
                   preferred_element_type=jnp.float32)

    # (H, B*N, hd) -> (H*B, N, hd): split along the sublane-tile boundary
    # (N = 8), so attention only mixes tokens within each (head, batch) group.
    G = NUM_HEADS * B
    q = q.reshape(G, N, HEAD_DIM)
    k = k.reshape(G, N, HEAD_DIM)
    v = v.reshape(G, N, HEAD_DIM)

    s = jnp.einsum('gqd,gkd->gqk', q, k, preferred_element_type=jnp.float32)
    s = s - jnp.max(s, axis=-1, keepdims=True)
    p = jnp.exp(s)
    # softmax denominator on the EUP slot (approx reciprocal, ~1e-4 rel err)
    p = p * pl.reciprocal(jnp.sum(p, axis=-1, keepdims=True), approx=True)
    heads = jnp.einsum('gqk,gkd->gqd', p, v, preferred_element_type=jnp.float32)

    # Output projection: Wp stored per-head, transposed to (H, C, hd); sum the
    # per-head partials over the leading axis (VPU adds, no relayout).
    heads = heads.reshape(NUM_HEADS, M, HEAD_DIM)    # inverse tile-aligned merge
    attn = jnp.einsum('hmd,hcd->hmc', heads, wattn_ref[3],
                      preferred_element_type=jnp.float32)   # (H, M, C)
    attn_out = jnp.sum(attn, axis=0) + bp            # (M, C)

    x1 = x + attn_out                                # residual 1

    # ---------------- norm2 + MLP + residual ---------------------------------
    xn2 = _layernorm(x1, g2, b2)
    h1 = jnp.dot(xn2, wmlp_ref[0],
                 preferred_element_type=jnp.float32) + bf1    # (M, MLP_HIDDEN)
    # tanh GELU lowers to the (otherwise idle) EUP slot; ~3e-4 max abs dev vs
    # torch's exact erf GELU, inside the test tolerance.
    # TODO(synk): use approximate=False if exact erf parity is required.
    h1 = jax.nn.gelu(h1, approximate=True)
    h2 = jnp.einsum('mh,ch->mc', h1, wmlp_ref[1],
                    preferred_element_type=jnp.float32) + bf2  # W2 stored transposed

    o_ref[...] = (x1 + h2).astype(o_ref.dtype)


def transformer_block(x, packed):
    """x: (B, N, C) float32.  packed: dict from pack_params()."""
    Bb, Nn, Cc = x.shape
    assert (Bb, Nn, Cc) == (B, N, C)
    xm = x.reshape(Bb * Nn, Cc)          # fold batch into M (free outside kernel)

    vmem = pl.BlockSpec(memory_space=pltpu.MemorySpace.VMEM)
    out = pl.pallas_call(
        block_kernel,
        out_shape=jax.ShapeDtypeStruct((Bb * Nn, Cc), x.dtype),
        in_specs=[vmem] * 5,
        out_specs=vmem,
    )(xm, packed["vecs"], packed["bf1"], packed["w_attn"], packed["w_mlp"])
    return out.reshape(Bb, Nn, Cc)


def init_params(key):
    """PyTorch-equivalent parameters (weights stored (in_features, out_features))."""
    ks = jax.random.split(key, 8)
    s = 0.02
    f32 = jnp.float32
    return {
        "g1": jnp.ones((C,), f32), "b1": jnp.zeros((C,), f32),
        "wq": s * jax.random.normal(ks[0], (C, C), f32),
        "wk": s * jax.random.normal(ks[1], (C, C), f32),
        "wv": s * jax.random.normal(ks[2], (C, C), f32),
        "wp": s * jax.random.normal(ks[3], (C, C), f32),
        "bp": s * jax.random.normal(ks[4], (C,), f32),
        "g2": jnp.ones((C,), f32), "b2": jnp.zeros((C,), f32),
        "w1": s * jax.random.normal(ks[5], (C, MLP_HIDDEN), f32),
        "bf1": jnp.zeros((MLP_HIDDEN,), f32),
        "w2": s * jax.random.normal(ks[6], (MLP_HIDDEN, C), f32),
        "bf2": jnp.zeros((C,), f32),
    }


def pack_params(p):
    """One-time layout prep: per-head weights + packed slabs for the kernel."""
    def heads_of(w):                                  # (C, C) -> (H, C, hd)
        return w.reshape(C, NUM_HEADS, HEAD_DIM).transpose(1, 0, 2)

    wq_h = heads_of(p["wq"]) * SCALE                  # fold qk scale into Wq
    wk_h = heads_of(p["wk"])
    wv_h = heads_of(p["wv"])
    # Wp transposed per head: wpT[h, c, d] = Wp[h*hd + d, c]
    wpT_h = p["wp"].reshape(NUM_HEADS, HEAD_DIM, C).transpose(0, 2, 1)
    w_attn = jnp.stack([wq_h, wk_h, wv_h, wpT_h], axis=0)      # (4, H, C, hd)

    w_mlp = jnp.stack([p["w1"], p["w2"].T], axis=0)            # (2, C, MLP_HIDDEN)

    vecs = jnp.stack([p["g1"], p["b1"], p["bp"],
                      p["g2"], p["b2"], p["bf2"]], axis=0)     # (6, C)
    bf1 = p["bf1"].reshape(1, MLP_HIDDEN)
    return {"w_attn": w_attn, "w_mlp": w_mlp, "vecs": vecs, "bf1": bf1}


def reference_block(x, p):
    """Pure-JAX reference replicating the PyTorch forward semantics exactly."""
    def ln(v, g, b):
        mu = jnp.mean(v, -1, keepdims=True)
        var = jnp.mean((v - mu) ** 2, -1, keepdims=True)
        return (v - mu) / jnp.sqrt(var + LN_EPS) * g + b

    Bb, Nn, Cc = x.shape
    xn = ln(x, p["g1"], p["b1"])
    q = (xn @ p["wq"]).reshape(Bb, Nn, NUM_HEADS, HEAD_DIM).transpose(0, 2, 1, 3)
    k = (xn @ p["wk"]).reshape(Bb, Nn, NUM_HEADS, HEAD_DIM).transpose(0, 2, 1, 3)
    v = (xn @ p["wv"]).reshape(Bb, Nn, NUM_HEADS, HEAD_DIM).transpose(0, 2, 1, 3)
    attn = jax.nn.softmax((q @ jnp.swapaxes(k, -1, -2)) * SCALE, axis=-1)
    y = (attn @ v).transpose(0, 2, 1, 3).reshape(Bb, Nn, Cc)
    y = y @ p["wp"] + p["bp"]
    x = x + y
    xn2 = ln(x, p["g2"], p["b2"])
    h = jax.nn.gelu(xn2 @ p["w1"] + p["bf1"], approximate=False)
    return x + (h @ p["w2"] + p["bf2"])


if __name__ == "__main__":
    key = jax.random.PRNGKey(0)
    kx, kp = jax.random.split(key)
    x = jax.random.normal(kx, (B, N, C), jnp.float32)
    params = init_params(kp)
    packed = pack_params(params)

    out = transformer_block(x, packed)
    jax.block_until_ready(out)

    ref = reference_block(x, params)
    assert out.shape == (B, N, C)
    # approx softmax reciprocal + tanh GELU -> slightly loosened tolerance
    assert jnp.allclose(out, ref, atol=2e-3, rtol=2e-3), "mismatch vs JAX reference"
    print("KERNEL_OK")
</pallas_src>

<mosaic_0001>
module attributes {stable_mosaic.version = 11 : i64} {
  func.func @block_kernel(%arg0: memref<16x32xf32, #tpu.memory_space<vmem>>, %arg1: memref<6x32xf32, #tpu.memory_space<vmem>>, %arg2: memref<1x128xf32, #tpu.memory_space<vmem>>, %arg3: memref<4x4x32x8xf32, #tpu.memory_space<vmem>>, %arg4: memref<2x32x128xf32, #tpu.memory_space<vmem>>, %arg5: memref<16x32xf32, #tpu.memory_space<vmem>>) attributes {dimension_semantics = [], scalar_prefetch = 0 : i64, scratch_operands = 0 : i64, tpu.core_type = #tpu.core_type<tc>} {
    %c0 = arith.constant 0 : index
    %c0_0 = arith.constant 0 : index
    %0 = vector.load %arg0[%c0, %c0_0] : memref<16x32xf32, #tpu.memory_space<vmem>>, vector<16x32xf32>
    %c0_1 = arith.constant 0 : index
    %c0_2 = arith.constant 0 : index
    %1 = vector.load %arg1[%c0_1, %c0_2] : memref<6x32xf32, #tpu.memory_space<vmem>>, vector<1x32xf32>
    %c1 = arith.constant 1 : index
    %c0_3 = arith.constant 0 : index
    %2 = vector.load %arg1[%c1, %c0_3] : memref<6x32xf32, #tpu.memory_space<vmem>>, vector<1x32xf32>
    %c2 = arith.constant 2 : index
    %c0_4 = arith.constant 0 : index
    %3 = vector.load %arg1[%c2, %c0_4] : memref<6x32xf32, #tpu.memory_space<vmem>>, vector<1x32xf32>
    %c3 = arith.constant 3 : index
    %c0_5 = arith.constant 0 : index
    %4 = vector.load %arg1[%c3, %c0_5] : memref<6x32xf32, #tpu.memory_space<vmem>>, vector<1x32xf32>
    %c4 = arith.constant 4 : index
    %c0_6 = arith.constant 0 : index
    %5 = vector.load %arg1[%c4, %c0_6] : memref<6x32xf32, #tpu.memory_space<vmem>>, vector<1x32xf32>
    %c5 = arith.constant 5 : index
    %c0_7 = arith.constant 0 : index
    %6 = vector.load %arg1[%c5, %c0_7] : memref<6x32xf32, #tpu.memory_space<vmem>>, vector<1x32xf32>
    %c0_8 = arith.constant 0 : index
    %c0_9 = arith.constant 0 : index
    %7 = vector.load %arg2[%c0_8, %c0_9] : memref<1x128xf32, #tpu.memory_space<vmem>>, vector<1x128xf32>
    %cst = arith.constant dense<0.000000e+00> : vector<16xf32>
    %8 = vector.multi_reduction <add>, %0, %cst [1] : vector<16x32xf32> to vector<16xf32>
    %9 = vector.shape_cast %8 : vector<16xf32> to vector<16x1xf32>
    %cst_10 = arith.constant 3.200000e+01 : f32
    %10 = vector.broadcast %cst_10 : f32 to vector<16x1xf32>
    %11 = arith.divf %9, %10 : vector<16x1xf32>
    %12 = vector.broadcast %11 : vector<16x1xf32> to vector<16x32xf32>
    %13 = arith.subf %0, %12 : vector<16x32xf32>
    %14 = arith.mulf %13, %13 : vector<16x32xf32>
    %cst_11 = arith.constant dense<0.000000e+00> : vector<16xf32>
    %15 = vector.multi_reduction <add>, %14, %cst_11 [1] : vector<16x32xf32> to vector<16xf32>
    %16 = vector.shape_cast %15 : vector<16xf32> to vector<16x1xf32>
    %cst_12 = arith.constant 3.200000e+01 : f32
    %17 = vector.broadcast %cst_12 : f32 to vector<16x1xf32>
    %18 = arith.divf %16, %17 : vector<16x1xf32>
    %19 = vector.broadcast %11 : vector<16x1xf32> to vector<16x32xf32>
    %20 = arith.subf %0, %19 : vector<16x32xf32>
    %cst_13 = arith.constant 9.99999974E-6 : f32
    %21 = vector.broadcast %cst_13 : f32 to vector<16x1xf32>
    %22 = arith.addf %18, %21 : vector<16x1xf32>
    %23 = math.rsqrt %22 : vector<16x1xf32>
    %24 = vector.broadcast %23 : vector<16x1xf32> to vector<16x32xf32>
    %25 = arith.mulf %20, %24 : vector<16x32xf32>
    %26 = vector.broadcast %1 : vector<1x32xf32> to vector<16x32xf32>
    %27 = arith.mulf %25, %26 : vector<16x32xf32>
    %28 = vector.broadcast %2 : vector<1x32xf32> to vector<16x32xf32>
    %29 = arith.addf %27, %28 : vector<16x32xf32>
    %30 = vector.shape_cast %29 : vector<16x32xf32> to vector<1x16x32xf32>
    %31 = vector.broadcast %30 : vector<1x16x32xf32> to vector<4x16x32xf32>
    %c0_14 = arith.constant 0 : index
    %c0_15 = arith.constant 0 : index
    %c0_16 = arith.constant 0 : index
    %c0_17 = arith.constant 0 : index
    %32 = vector.load %arg3[%c0_14, %c0_15, %c0_16, %c0_17] : memref<4x4x32x8xf32, #tpu.memory_space<vmem>>, vector<1x4x32x8xf32>
    %33 = vector.shape_cast %32 : vector<1x4x32x8xf32> to vector<4x32x8xf32>
    "tpu.trace_start"() <{level = 10 : i32, message = "hmc,hcd->hmd"}> : () -> ()
    %cst_18 = arith.constant dense<0.000000e+00> : vector<4x16x8xf32>
    %34 = tpu.matmul %31, %33, %cst_18 {dimension_numbers = #tpu.dot_dimension_numbers<[2], [1], [1], [2], [0, 0, 0, 1, 1, 2], [0], [0]>} : vector<4x16x32xf32>, vector<4x32x8xf32>, vector<4x16x8xf32> -> vector<4x16x8xf32>
    "tpu.trace_stop"() : () -> ()
    %c1_19 = arith.constant 1 : index
    %c0_20 = arith.constant 0 : index
    %c0_21 = arith.constant 0 : index
    %c0_22 = arith.constant 0 : index
    %35 = vector.load %arg3[%c1_19, %c0_20, %c0_21, %c0_22] : memref<4x4x32x8xf32, #tpu.memory_space<vmem>>, vector<1x4x32x8xf32>
    %36 = vector.shape_cast %35 : vector<1x4x32x8xf32> to vector<4x32x8xf32>
    "tpu.trace_start"() <{level = 10 : i32, message = "hmc,hcd->hmd"}> : () -> ()
    %cst_23 = arith.constant dense<0.000000e+00> : vector<4x16x8xf32>
    %37 = tpu.matmul %31, %36, %cst_23 {dimension_numbers = #tpu.dot_dimension_numbers<[2], [1], [1], [2], [0, 0, 0, 1, 1, 2], [0], [0]>} : vector<4x16x32xf32>, vector<4x32x8xf32>, vector<4x16x8xf32> -> vector<4x16x8xf32>
    "tpu.trace_stop"() : () -> ()
    %c2_24 = arith.constant 2 : index
    %c0_25 = arith.constant 0 : index
    %c0_26 = arith.constant 0 : index
    %c0_27 = arith.constant 0 : index
    %38 = vector.load %arg3[%c2_24, %c0_25, %c0_26, %c0_27] : memref<4x4x32x8xf32, #tpu.memory_space<vmem>>, vector<1x4x32x8xf32>
    %39 = vector.shape_cast %38 : vector<1x4x32x8xf32> to vector<4x32x8xf32>
    "tpu.trace_start"() <{level = 10 : i32, message = "hmc,hcd->hmd"}> : () -> ()
    %cst_28 = arith.constant dense<0.000000e+00> : vector<4x16x8xf32>
    %40 = tpu.matmul %31, %39, %cst_28 {dimension_numbers = #tpu.dot_dimension_numbers<[2], [1], [1], [2], [0, 0, 0, 1, 1, 2], [0], [0]>} : vector<4x16x32xf32>, vector<4x32x8xf32>, vector<4x16x8xf32> -> vector<4x16x8xf32>
    "tpu.trace_stop"() : () -> ()
    %41 = vector.shape_cast %34 : vector<4x16x8xf32> to vector<8x8x8xf32>
    %42 = vector.shape_cast %37 : vector<4x16x8xf32> to vector<8x8x8xf32>
    %43 = vector.shape_cast %40 : vector<4x16x8xf32> to vector<8x8x8xf32>
    "tpu.trace_start"() <{level = 10 : i32, message = "gqd,gkd->gqk"}> : () -> ()
    %cst_29 = arith.constant dense<0.000000e+00> : vector<8x8x8xf32>
    %44 = tpu.matmul %41, %42, %cst_29 {dimension_numbers = #tpu.dot_dimension_numbers<[2], [2], [1], [1], [0, 0, 0, 1, 1, 1], [0], [0]>} : vector<8x8x8xf32>, vector<8x8x8xf32>, vector<8x8x8xf32> -> vector<8x8x8xf32>
    "tpu.trace_stop"() : () -> ()
    %cst_30 = arith.constant dense<0xFF800000> : vector<8x8xf32>
    %45 = vector.multi_reduction <maximumf>, %44, %cst_30 [2] : vector<8x8x8xf32> to vector<8x8xf32>
    %46 = vector.shape_cast %45 : vector<8x8xf32> to vector<8x8x1xf32>
    %47 = vector.broadcast %46 : vector<8x8x1xf32> to vector<8x8x8xf32>
    %48 = arith.subf %44, %47 : vector<8x8x8xf32>
    %49 = math.exp %48 : vector<8x8x8xf32>
    %cst_31 = arith.constant dense<0.000000e+00> : vector<8x8xf32>
    %50 = vector.multi_reduction <add>, %49, %cst_31 [2] : vector<8x8x8xf32> to vector<8x8xf32>
    %51 = vector.shape_cast %50 : vector<8x8xf32> to vector<8x8x1xf32>
    %52 = tpu.reciprocal %51 {approx = true} : vector<8x8x1xf32> -> vector<8x8x1xf32>
    %53 = vector.broadcast %52 : vector<8x8x1xf32> to vector<8x8x8xf32>
    %54 = arith.mulf %49, %53 : vector<8x8x8xf32>
    "tpu.trace_start"() <{level = 10 : i32, message = "gqk,gkd->gqd"}> : () -> ()
    %cst_32 = arith.constant dense<0.000000e+00> : vector<8x8x8xf32>
    %55 = tpu.matmul %54, %43, %cst_32 {dimension_numbers = #tpu.dot_dimension_numbers<[2], [1], [1], [2], [0, 0, 0, 1, 1, 2], [0], [0]>} : vector<8x8x8xf32>, vector<8x8x8xf32>, vector<8x8x8xf32> -> vector<8x8x8xf32>
    "tpu.trace_stop"() : () -> ()
    %56 = vector.shape_cast %55 : vector<8x8x8xf32> to vector<4x16x8xf32>
    %c3_33 = arith.constant 3 : index
    %c0_34 = arith.constant 0 : index
    %c0_35 = arith.constant 0 : index
    %c0_36 = arith.constant 0 : index
    %57 = vector.load %arg3[%c3_33, %c0_34, %c0_35, %c0_36] : memref<4x4x32x8xf32, #tpu.memory_space<vmem>>, vector<1x4x32x8xf32>
    %58 = vector.shape_cast %57 : vector<1x4x32x8xf32> to vector<4x32x8xf32>
    "tpu.trace_start"() <{level = 10 : i32, message = "hmd,hcd->hmc"}> : () -> ()
    %cst_37 = arith.constant dense<0.000000e+00> : vector<4x16x32xf32>
    %59 = tpu.matmul %56, %58, %cst_37 {dimension_numbers = #tpu.dot_dimension_numbers<[2], [2], [1], [1], [0, 0, 0, 1, 1, 1], [0], [0]>} : vector<4x16x8xf32>, vector<4x32x8xf32>, vector<4x16x32xf32> -> vector<4x16x32xf32>
    "tpu.trace_stop"() : () -> ()
    %cst_38 = arith.constant dense<0.000000e+00> : vector<16x32xf32>
    %60 = vector.multi_reduction <add>, %59, %cst_38 [0] : vector<4x16x32xf32> to vector<16x32xf32>
    %61 = vector.broadcast %3 : vector<1x32xf32> to vector<16x32xf32>
    %62 = arith.addf %60, %61 : vector<16x32xf32>
    %63 = arith.addf %0, %62 : vector<16x32xf32>
    %cst_39 = arith.constant dense<0.000000e+00> : vector<16xf32>
    %64 = vector.multi_reduction <add>, %63, %cst_39 [1] : vector<16x32xf32> to vector<16xf32>
    %65 = vector.shape_cast %64 : vector<16xf32> to vector<16x1xf32>
    %cst_40 = arith.constant 3.200000e+01 : f32
    %66 = vector.broadcast %cst_40 : f32 to vector<16x1xf32>
    %67 = arith.divf %65, %66 : vector<16x1xf32>
    %68 = vector.broadcast %67 : vector<16x1xf32> to vector<16x32xf32>
    %69 = arith.subf %63, %68 : vector<16x32xf32>
    %70 = arith.mulf %69, %69 : vector<16x32xf32>
    %cst_41 = arith.constant dense<0.000000e+00> : vector<16xf32>
    %71 = vector.multi_reduction <add>, %70, %cst_41 [1] : vector<16x32xf32> to vector<16xf32>
    %72 = vector.shape_cast %71 : vector<16xf32> to vector<16x1xf32>
    %cst_42 = arith.constant 3.200000e+01 : f32
    %73 = vector.broadcast %cst_42 : f32 to vector<16x1xf32>
    %74 = arith.divf %72, %73 : vector<16x1xf32>
    %75 = vector.broadcast %67 : vector<16x1xf32> to vector<16x32xf32>
    %76 = arith.subf %63, %75 : vector<16x32xf32>
    %cst_43 = arith.constant 9.99999974E-6 : f32
    %77 = vector.broadcast %cst_43 : f32 to vector<16x1xf32>
    %78 = arith.addf %74, %77 : vector<16x1xf32>
    %79 = math.rsqrt %78 : vector<16x1xf32>
    %80 = vector.broadcast %79 : vector<16x1xf32> to vector<16x32xf32>
    %81 = arith.mulf %76, %80 : vector<16x32xf32>
    %82 = vector.broadcast %4 : vector<1x32xf32> to vector<16x32xf32>
    %83 = arith.mulf %81, %82 : vector<16x32xf32>
    %84 = vector.broadcast %5 : vector<1x32xf32> to vector<16x32xf32>
    %85 = arith.addf %83, %84 : vector<16x32xf32>
    %c0_44 = arith.constant 0 : index
    %c0_45 = arith.constant 0 : index
    %c0_46 = arith.constant 0 : index
    %86 = vector.load %arg4[%c0_44, %c0_45, %c0_46] : memref<2x32x128xf32, #tpu.memory_space<vmem>>, vector<1x32x128xf32>
    %87 = vector.shape_cast %86 : vector<1x32x128xf32> to vector<32x128xf32>
    %cst_47 = arith.constant dense<0.000000e+00> : vector<16x128xf32>
    %88 = tpu.matmul %85, %87, %cst_47 {dimension_numbers = #tpu.dot_dimension_numbers<[1], [0], [0], [1], [0, 0, 1, 1], [], []>} : vector<16x32xf32>, vector<32x128xf32>, vector<16x128xf32> -> vector<16x128xf32>
    %89 = vector.broadcast %7 : vector<1x128xf32> to vector<16x128xf32>
    %90 = arith.addf %88, %89 : vector<16x128xf32>
    %91 = arith.mulf %90, %90 : vector<16x128xf32>
    %92 = arith.mulf %90, %91 : vector<16x128xf32>
    %cst_48 = arith.constant 4.471500e-02 : f32
    %93 = vector.broadcast %cst_48 : f32 to vector<16x128xf32>
    %94 = arith.mulf %93, %92 : vector<16x128xf32>
    %95 = arith.addf %90, %94 : vector<16x128xf32>
    %cst_49 = arith.constant 0.797884583 : f32
    %96 = vector.broadcast %cst_49 : f32 to vector<16x128xf32>
    %97 = arith.mulf %96, %95 : vector<16x128xf32>
    %98 = math.tanh %97 : vector<16x128xf32>
    %cst_50 = arith.constant 1.000000e+00 : f32
    %99 = vector.broadcast %cst_50 : f32 to vector<16x128xf32>
    %100 = arith.addf %99, %98 : vector<16x128xf32>
    %cst_51 = arith.constant 5.000000e-01 : f32
    %101 = vector.broadcast %cst_51 : f32 to vector<16x128xf32>
    %102 = arith.mulf %101, %100 : vector<16x128xf32>
    %103 = arith.mulf %90, %102 : vector<16x128xf32>
    %c1_52 = arith.constant 1 : index
    %c0_53 = arith.constant 0 : index
    %c0_54 = arith.constant 0 : index
    %104 = vector.load %arg4[%c1_52, %c0_53, %c0_54] : memref<2x32x128xf32, #tpu.memory_space<vmem>>, vector<1x32x128xf32>
    %105 = vector.shape_cast %104 : vector<1x32x128xf32> to vector<32x128xf32>
    "tpu.trace_start"() <{level = 10 : i32, message = "mh,ch->mc"}> : () -> ()
    %cst_55 = arith.constant dense<0.000000e+00> : vector<16x32xf32>
    %106 = tpu.matmul %103, %105, %cst_55 {dimension_numbers = #tpu.dot_dimension_numbers<[1], [1], [0], [0], [0, 0, 1, 0], [], []>} : vector<16x128xf32>, vector<32x128xf32>, vector<16x32xf32> -> vector<16x32xf32>
    "tpu.trace_stop"() : () -> ()
    %107 = vector.broadcast %6 : vector<1x32xf32> to vector<16x32xf32>
    %108 = arith.addf %106, %107 : vector<16x32xf32>
    %109 = arith.addf %63, %108 : vector<16x32xf32>
    %c0_56 = arith.constant 0 : index
    %c0_57 = arith.constant 0 : index
    %110 = vector.load %arg5[%c0_56, %c0_57] : memref<16x32xf32, #tpu.memory_space<vmem>>, vector<16x32xf32>
    tpu.vector_store %arg5[%c0_56, %c0_57], %109 {strides = array<i32>} : memref<16x32xf32, #tpu.memory_space<vmem>>, vector<16x32xf32>,
    return
  }
}

</mosaic_0001>

<llo_original>
// kernel: tpu_custom_call.1
$region0: #{tpu_custom_call.1}
  #allocation0 [shape = 'u32[]', space=smem, size = 0x4, offset = 0x4, fixed_abs, tag = 'smem constant byte address 0x4 - core index']
  #allocation1 [shape = 'u32[144,128]{1,0:T(1,128)}', space=vmem, size = 0x12000, scoped, tag = 'internal scratch']
  %s0 = inlined_call_operand.vmem [shape: f32[16,32], index: 0, kind: input, shape index: {}]
  %s1 = inlined_call_operand.vmem [shape: f32[6,32], index: 1, kind: input, shape index: {}]
  %s2 = inlined_call_operand.vmem [shape: f32[1,128], index: 2, kind: input, shape index: {}]
  %s3 = inlined_call_operand.vmem [shape: f32[4,4,32,8], index: 3, kind: input, shape index: {}]
  %s4 = inlined_call_operand.vmem [shape: f32[2,32,128], index: 4, kind: input, shape index: {}]
  %s5 = inlined_call_operand.hbm [shape: f32[16,32], index: 5, kind: output, shape index: {}]
  %s6 = sld [smem:[#allocation0]]
  $region30: #{tpu_custom_call.1} parent=0
    _
  %s8 = ssub.s32 1, %s6
  %s9 = scalar_select 0, %s8, %s6
  $region1: #{tpu_custom_call.1} parent=0
    #allocation2 [shape = 'u8[8192]{0}', space=vmem, size = 0x2000, scoped, tag = 'output window, operand 0, single buffered']
    #allocation3 [shape = 's32[1]{0}', space=sflag, size = 0x4, scoped, tag = 'scoped memory for tpu_custom_call.1']
    %10 = vsyncpa [#allocation3], 0
    // Predicated region
    $region2: #{tpu_custom_call.1} parent=1 // pred_check
      _
    $region3: #{tpu_custom_call.1} parent=1 // pred_check_branch
      %12 = sbr.rel (0) target = $region5
    $region4: #{tpu_custom_call.1} parent=1 // pred_region
      _
    $region5: #{tpu_custom_call.1} parent=1 // pred_fallthru
      _
    // Predicated region
    $region6: #{tpu_custom_call.1} parent=1 // pred_check
      _
    $region7: #{tpu_custom_call.1} parent=1 // pred_check_branch
      %14 = sbr.rel (0) target = $region9
    $region8: #{tpu_custom_call.1} parent=1 // pred_region
      _
    $region9: #{tpu_custom_call.1} parent=1 // pred_fallthru
      _
    // Predicated region
    $region10: #{tpu_custom_call.1} parent=1 // pred_check
      _
    $region11: #{tpu_custom_call.1} parent=1 // pred_check_branch
      %16 = sbr.rel (0) target = $region13
    $region12: #{tpu_custom_call.1} parent=1 // pred_region
      _
    $region13: #{tpu_custom_call.1} parent=1 // pred_fallthru
      _
    // Predicated region
    $region14: #{tpu_custom_call.1} parent=1 // pred_check
      _
    $region15: #{tpu_custom_call.1} parent=1 // pred_check_branch
      %18 = sbr.rel (0) target = $region17
    $region16: #{tpu_custom_call.1} parent=1 // pred_region
      _
    $region17: #{tpu_custom_call.1} parent=1 // pred_fallthru
      _
    // Predicated region
    $region18: #{tpu_custom_call.1} parent=1 // pred_check
      _
    $region19: #{tpu_custom_call.1} parent=1 // pred_check_branch
      %20 = sbr.rel (0) target = $region21
    $region20: #{tpu_custom_call.1} parent=1 // pred_region
      _
    $region21: #{tpu_custom_call.1} parent=1 // pred_fallthru
      _
    %v21 = vld [vmem:[%s0] sm:$0xff]
    %v22 = vld [vmem:[%s0 + $0x8] sm:$0xff]
    %v23 = vld [vmem:[%s1] sm:$0x1]
    %v24 = vld [vmem:[%s1 + $0x1] sm:$0x1]
    %v25 = vld [vmem:[%s1 + $0x2] sm:$0x1]
    %v26 = vld [vmem:[%s1 + $0x3] sm:$0x1]
    %v27 = vld [vmem:[%s1 + $0x4] sm:$0x1]
    %v28 = vld [vmem:[%s1 + $0x5] sm:$0x1]
    %v29 = vld [vmem:[%s2] sm:$0x1]
    %vm30 = vcmask 261120
    %v31 = vsel %vm30, %v21, 0.0
    %32 = vadd.xlane.f32.xlu0 %v31
    %v33 = vpop.xlane.xlu0 %32
    %v34 = vsel %vm30, %v22, 0.0
    %35 = vadd.xlane.f32.xlu0 %v34
    %v36 = vpop.xlane.xlu0 %35
    %v37 = vrcp.pop 32.0
    %v38 = vmul.f32 %v33, %v37
    %v39 = vmul.f32 %v36, %v37
    %v40 = vsub.f32 %v21, %v38
    %v41 = vsub.f32 %v22, %v39
    %v42 = vmul.f32 %v40, %v40
    %v43 = vmul.f32 %v41, %v41
    %v44 = vsel %vm30, %v42, 0.0
    %45 = vadd.xlane.f32.xlu0 %v44
    %v46 = vpop.xlane.xlu0 %45
    %v47 = vsel %vm30, %v43, 0.0
    %48 = vadd.xlane.f32.xlu0 %v47
    %v49 = vpop.xlane.xlu0 %48
    %v50 = vmul.f32 %v46, %v37
    %v51 = vmul.f32 %v49, %v37
    %v52 = vadd.f32 %v50, 1e-05
    %v53 = vadd.f32 %v51, 1e-05
    %v54 = vrsqrt.pop %v52
    %v55 = vrsqrt.pop %v53
    %v56 = vmul.f32 %v40, %v54
    %v57 = vmul.f32 %v41, %v55
    %v58 = vlaneseq
    %v59 = vshrl.u32 %v58, 7
    %v60 = vsub.s32 0, %v59
    %v61 = vrot.slane %v23, %v60
    %v62 = vmul.f32 %v56, %v61
    %v63 = vmul.f32 %v57, %v61
    %v64 = vlaneseq
    %v65 = vshrl.u32 %v64, 7
    %v66 = vsub.s32 0, %v65
    %v67 = vrot.slane %v24, %v66
    %v68 = vadd.f32 %v62, %v67
    %v69 = vadd.f32 %v63, %v67
    %v70 = vld [vmem:[%s3] sm:$0xff]
    %v71 = vld [vmem:[%s3 + $0x8] sm:$0xff]
    %v72 = vld [vmem:[%s3 + $0x10] sm:$0xff]
    %v73 = vld [vmem:[%s3 + $0x18] sm:$0xff]
    %v74 = vld [vmem:[%s3 + $0x20] sm:$0xff]
    %v75 = vld [vmem:[%s3 + $0x28] sm:$0xff]
    %v76 = vld [vmem:[%s3 + $0x30] sm:$0xff]
    %v77 = vld [vmem:[%s3 + $0x38] sm:$0xff]
    %v78 = vld [vmem:[%s3 + $0x40] sm:$0xff]
    %v79 = vld [vmem:[%s3 + $0x48] sm:$0xff]
    %v80 = vld [vmem:[%s3 + $0x50] sm:$0xff]
    %v81 = vld [vmem:[%s3 + $0x58] sm:$0xff]
    %v82 = vld [vmem:[%s3 + $0x60] sm:$0xff]
    %v83 = vld [vmem:[%s3 + $0x68] sm:$0xff]
    %v84 = vld [vmem:[%s3 + $0x70] sm:$0xff]
    %v85 = vld [vmem:[%s3 + $0x78] sm:$0xff]
    %v87 = vsel %vm30, %v68, 0
    %v90 = vsel %vm30, %v69, 0
    %92 = vmatprep.subr.mxu0 0.0
    %93 = vmatpush1.msra.mxu0 0.0
    %94 = vmatprep.subr.mxu0 0.0
    %95 = vmatpush1.msra.mxu0 0.0
    %96 = vmatprep.subr.mxu0 0.0
    %97 = vmatpush1.msra.mxu0 0.0
    %98 = vmatprep.subr.mxu0 0.0
    %99 = vmatpush1.msra.mxu0 0.0
    %100 = vmatprep.subr.mxu0 0.0
    %101 = vmatpush1.msra.mxu0 0.0
    %102 = vmatprep.subr.mxu0 0.0
    %103 = vmatpush1.msra.mxu0 0.0
    %104 = vmatprep.subr.mxu0 0.0
    %105 = vmatpush1.msra.mxu0 0.0
    %106 = vmatprep.subr.mxu0 0.0
    %107 = vmatpush1.msra.mxu0 0.0
    %108 = vmatprep.subr.mxu0 0.0
    %109 = vmatpush1.msra.mxu0 0.0
    %110 = vmatprep.subr.mxu0 0.0
    %111 = vmatpush1.msra.mxu0 0.0
    %112 = vmatprep.subr.mxu0 0.0
    %113 = vmatpush1.msra.mxu0 0.0
    %114 = vmatprep.subr.mxu0 0.0
    %115 = vmatpush1.msra.mxu0 0.0
    %116 = vmatprep.subr.mxu0 0.0
    %117 = vmatpush1.msra.mxu0 %v73
    %118 = vmatprep.subr.mxu0 0.0
    %119 = vmatpush1.msra.mxu0 %v72
    %120 = vmatprep.subr.mxu0 0.0
    %121 = vmatpush1.msra.mxu0 %v71
    %122 = vmatprep.subr.mxu0 0.0
    %123 = vmatpush1.msra.mxu0 %v70
    %124 = vmatprep.subr.mxu0 0.0
    %125 = vmatpush2.msra.mxu0 0.0
    %126 = vmatprep.subr.mxu0 0.0
    %127 = vmatpush2.msra.mxu0 0.0
    %128 = vmatprep.subr.mxu0 0.0
    %129 = vmatpush2.msra.mxu0 0.0
    %130 = vmatprep.subr.mxu0 0.0
    %131 = vmatpush2.msra.mxu0 0.0
    %132 = vmatprep.subr.mxu0 0.0
    %133 = vmatpush2.msra.mxu0 0.0
    %134 = vmatprep.subr.mxu0 0.0
    %135 = vmatpush2.msra.mxu0 0.0
    %136 = vmatprep.subr.mxu0 0.0
    %137 = vmatpush2.msra.mxu0 0.0
    %138 = vmatprep.subr.mxu0 0.0
    %139 = vmatpush2.msra.mxu0 0.0
    %140 = vmatprep.subr.mxu0 0.0
    %141 = vmatpush2.msra.mxu0 0.0
    %142 = vmatprep.subr.mxu0 0.0
    %143 = vmatpush2.msra.mxu0 0.0
    %144 = vmatprep.subr.mxu0 0.0
    %145 = vmatpush2.msra.mxu0 0.0
    %146 = vmatprep.subr.mxu0 0.0
    %147 = vmatpush2.msra.mxu0 0.0
    %148 = vmatprep.subr.mxu0 0.0
    %149 = vmatpush2.msra.mxu0 0.0
    %150 = vmatprep.subr.mxu0 0.0
    %151 = vmatpush2.msra.mxu0 0.0
    %152 = vmatprep.subr.mxu0 0.0
    %153 = vmatpush2.msra.mxu0 0.0
    %154 = vmatprep.subr.mxu0 0.0
    %155 = vmatpush2.msra.mxu0 0.0
    %156 = vmatprep.mubr.f32.mxu0 0.0
    %157 = vmatmul.mubr.f32.gmra.mxu0 %v87
    %v158 = vpop.f32.mrf.mxu0
    %v159 = vadd.f32 0.0, %v158
    %v160 = vpop.f32.mrf.mxu0
    %161 = vmatprep.mubr.f32.mxu0 0.0
    %162 = vmatmul.mubr.f32.gmra.mxu0 %v90
    %v163 = vpop.f32.mrf.mxu0
    %v164 = vadd.f32 0.0, %v163
    %v165 = vpop.f32.mrf.mxu0
    %166 = vdwg.mxu0
    %167 = vmatprep.subr.mxu0 0.0
    %168 = vmatpush1.msra.mxu0 0.0
    %169 = vmatprep.subr.mxu0 0.0
    %170 = vmatpush1.msra.mxu0 0.0
    %171 = vmatprep.subr.mxu0 0.0
    %172 = vmatpush1.msra.mxu0 0.0
    %173 = vmatprep.subr.mxu0 0.0
    %174 = vmatpush1.msra.mxu0 0.0
    %175 = vmatprep.subr.mxu0 0.0
    %176 = vmatpush1.msra.mxu0 0.0
    %177 = vmatprep.subr.mxu0 0.0
    %178 = vmatpush1.msra.mxu0 0.0
    %179 = vmatprep.subr.mxu0 0.0
    %180 = vmatpush1.msra.mxu0 0.0
    %181 = vmatprep.subr.mxu0 0.0
    %182 = vmatpush1.msra.mxu0 0.0
    %183 = vmatprep.subr.mxu0 0.0
    %184 = vmatpush1.msra.mxu0 0.0
    %185 = vmatprep.subr.mxu0 0.0
    %186 = vmatpush1.msra.mxu0 0.0
    %187 = vmatprep.subr.mxu0 0.0
    %188 = vmatpush1.msra.mxu0 0.0
    %189 = vmatprep.subr.mxu0 0.0
    %190 = vmatpush1.msra.mxu0 0.0
    %191 = vmatprep.subr.mxu0 0.0
    %192 = vmatpush1.msra.mxu0 %v77
    %193 = vmatprep.subr.mxu0 0.0
    %194 = vmatpush1.msra.mxu0 %v76
    %195 = vmatprep.subr.mxu0 0.0
    %196 = vmatpush1.msra.mxu0 %v75
    %197 = vmatprep.subr.mxu0 0.0
    %198 = vmatpush1.msra.mxu0 %v74
    %199 = vmatprep.subr.mxu0 0.0
    %200 = vmatpush2.msra.mxu0 0.0
    %201 = vmatprep.subr.mxu0 0.0
    %202 = vmatpush2.msra.mxu0 0.0
    %203 = vmatprep.subr.mxu0 0.0
    %204 = vmatpush2.msra.mxu0 0.0
    %205 = vmatprep.subr.mxu0 0.0
    %206 = vmatpush2.msra.mxu0 0.0
    %207 = vmatprep.subr.mxu0 0.0
    %208 = vmatpush2.msra.mxu0 0.0
    %209 = vmatprep.subr.mxu0 0.0
    %210 = vmatpush2.msra.mxu0 0.0
    %211 = vmatprep.subr.mxu0 0.0
    %212 = vmatpush2.msra.mxu0 0.0
    %213 = vmatprep.subr.mxu0 0.0
    %214 = vmatpush2.msra.mxu0 0.0
    %215 = vmatprep.subr.mxu0 0.0
    %216 = vmatpush2.msra.mxu0 0.0
    %217 = vmatprep.subr.mxu0 0.0
    %218 = vmatpush2.msra.mxu0 0.0
    %219 = vmatprep.subr.mxu0 0.0
    %220 = vmatpush2.msra.mxu0 0.0
    %221 = vmatprep.subr.mxu0 0.0
    %222 = vmatpush2.msra.mxu0 0.0
    %223 = vmatprep.subr.mxu0 0.0
    %224 = vmatpush2.msra.mxu0 0.0
    %225 = vmatprep.subr.mxu0 0.0
    %226 = vmatpush2.msra.mxu0 0.0
    %227 = vmatprep.subr.mxu0 0.0
    %228 = vmatpush2.msra.mxu0 0.0
    %229 = vmatprep.subr.mxu0 0.0
    %230 = vmatpush2.msra.mxu0 0.0
    %231 = vmatprep.mubr.f32.mxu0 0.0
    %232 = vmatmul.mubr.f32.gmra.mxu0 %v87
    %v233 = vpop.f32.mrf.mxu0
    %v234 = vadd.f32 0.0, %v233
    %v235 = vpop.f32.mrf.mxu0
    %236 = vmatprep.mubr.f32.mxu0 0.0
    %237 = vmatmul.mubr.f32.gmra.mxu0 %v90
    %v238 = vpop.f32.mrf.mxu0
    %v239 = vadd.f32 0.0, %v238
    %v240 = vpop.f32.mrf.mxu0
    %241 = vdwg.mxu0
    %242 = vmatprep.subr.mxu0 0.0
    %243 = vmatpush1.msra.mxu0 0.0
    %244 = vmatprep.subr.mxu0 0.0
    %245 = vmatpush1.msra.mxu0 0.0
    %246 = vmatprep.subr.mxu0 0.0
    %247 = vmatpush1.msra.mxu0 0.0
    %248 = vmatprep.subr.mxu0 0.0
    %249 = vmatpush1.msra.mxu0 0.0
    %250 = vmatprep.subr.mxu0 0.0
    %251 = vmatpush1.msra.mxu0 0.0
    %252 = vmatprep.subr.mxu0 0.0
    %253 = vmatpush1.msra.mxu0 0.0
    %254 = vmatprep.subr.mxu0 0.0
    %255 = vmatpush1.msra.mxu0 0.0
    %256 = vmatprep.subr.mxu0 0.0
    %257 = vmatpush1.msra.mxu0 0.0
    %258 = vmatprep.subr.mxu0 0.0
    %259 = vmatpush1.msra.mxu0 0.0
    %260 = vmatprep.subr.mxu0 0.0
    %261 = vmatpush1.msra.mxu0 0.0
    %262 = vmatprep.subr.mxu0 0.0
    %263 = vmatpush1.msra.mxu0 0.0
    %264 = vmatprep.subr.mxu0 0.0
    %265 = vmatpush1.msra.mxu0 0.0
    %266 = vmatprep.subr.mxu0 0.0
    %267 = vmatpush1.msra.mxu0 %v81
    %268 = vmatprep.subr.mxu0 0.0
    %269 = vmatpush1.msra.mxu0 %v80
    %270 = vmatprep.subr.mxu0 0.0
    %271 = vmatpush1.msra.mxu0 %v79
    %272 = vmatprep.subr.mxu0 0.0
    %273 = vmatpush1.msra.mxu0 %v78
    %274 = vmatprep.subr.mxu0 0.0
    %275 = vmatpush2.msra.mxu0 0.0
    %276 = vmatprep.subr.mxu0 0.0
    %277 = vmatpush2.msra.mxu0 0.0
    %278 = vmatprep.subr.mxu0 0.0
    %279 = vmatpush2.msra.mxu0 0.0
    %280 = vmatprep.subr.mxu0 0.0
    %281 = vmatpush2.msra.mxu0 0.0
    %282 = vmatprep.subr.mxu0 0.0
    %283 = vmatpush2.msra.mxu0 0.0
    %284 = vmatprep.subr.mxu0 0.0
    %285 = vmatpush2.msra.mxu0 0.0
    %286 = vmatprep.subr.mxu0 0.0
    %287 = vmatpush2.msra.mxu0 0.0
    %288 = vmatprep.subr.mxu0 0.0
    %289 = vmatpush2.msra.mxu0 0.0
    %290 = vmatprep.subr.mxu0 0.0
    %291 = vmatpush2.msra.mxu0 0.0
    %292 = vmatprep.subr.mxu0 0.0
    %293 = vmatpush2.msra.mxu0 0.0
    %294 = vmatprep.subr.mxu0 0.0
    %295 = vmatpush2.msra.mxu0 0.0
    %296 = vmatprep.subr.mxu0 0.0
    %297 = vmatpush2.msra.mxu0 0.0
    %298 = vmatprep.subr.mxu0 0.0
    %299 = vmatpush2.msra.mxu0 0.0
    %300 = vmatprep.subr.mxu0 0.0
    %301 = vmatpush2.msra.mxu0 0.0
    %302 = vmatprep.subr.mxu0 0.0
    %303 = vmatpush2.msra.mxu0 0.0
    %304 = vmatprep.subr.mxu0 0.0
    %305 = vmatpush2.msra.mxu0 0.0
    %306 = vmatprep.mubr.f32.mxu0 0.0
    %307 = vmatmul.mubr.f32.gmra.mxu0 %v87
    %v308 = vpop.f32.mrf.mxu0
    %v309 = vadd.f32 0.0, %v308
    %v310 = vpop.f32.mrf.mxu0
    %311 = vmatprep.mubr.f32.mxu0 0.0
    %312 = vmatmul.mubr.f32.gmra.mxu0 %v90
    %v313 = vpop.f32.mrf.mxu0
    %v314 = vadd.f32 0.0, %v313
    %v315 = vpop.f32.mrf.mxu0
    %316 = vdwg.mxu0
    %317 = vmatprep.subr.mxu0 0.0
    %318 = vmatpush1.msra.mxu0 0.0
    %319 = vmatprep.subr.mxu0 0.0
    %320 = vmatpush1.msra.mxu0 0.0
    %321 = vmatprep.subr.mxu0 0.0
    %322 = vmatpush1.msra.mxu0 0.0
    %323 = vmatprep.subr.mxu0 0.0
    %324 = vmatpush1.msra.mxu0 0.0
    %325 = vmatprep.subr.mxu0 0.0
    %326 = vmatpush1.msra.mxu0 0.0
    %327 = vmatprep.subr.mxu0 0.0
    %328 = vmatpush1.msra.mxu0 0.0
    %329 = vmatprep.subr.mxu0 0.0
    %330 = vmatpush1.msra.mxu0 0.0
    %331 = vmatprep.subr.mxu0 0.0
    %332 = vmatpush1.msra.mxu0 0.0
    %333 = vmatprep.subr.mxu0 0.0
    %334 = vmatpush1.msra.mxu0 0.0
    %335 = vmatprep.subr.mxu0 0.0
    %336 = vmatpush1.msra.mxu0 0.0
    %337 = vmatprep.subr.mxu0 0.0
    %338 = vmatpush1.msra.mxu0 0.0
    %339 = vmatprep.subr.mxu0 0.0
    %340 = vmatpush1.msra.mxu0 0.0
    %341 = vmatprep.subr.mxu0 0.0
    %342 = vmatpush1.msra.mxu0 %v85
    %343 = vmatprep.subr.mxu0 0.0
    %344 = vmatpush1.msra.mxu0 %v84
    %345 = vmatprep.subr.mxu0 0.0
    %346 = vmatpush1.msra.mxu0 %v83
    %347 = vmatprep.subr.mxu0 0.0
    %348 = vmatpush1.msra.mxu0 %v82
    %349 = vmatprep.subr.mxu0 0.0
    %350 = vmatpush2.msra.mxu0 0.0
    %351 = vmatprep.subr.mxu0 0.0
    %352 = vmatpush2.msra.mxu0 0.0
    %353 = vmatprep.subr.mxu0 0.0
    %354 = vmatpush2.msra.mxu0 0.0
    %355 = vmatprep.subr.mxu0 0.0
    %356 = vmatpush2.msra.mxu0 0.0
    %357 = vmatprep.subr.mxu0 0.0
    %358 = vmatpush2.msra.mxu0 0.0
    %359 = vmatprep.subr.mxu0 0.0
    %360 = vmatpush2.msra.mxu0 0.0
    %361 = vmatprep.subr.mxu0 0.0
    %362 = vmatpush2.msra.mxu0 0.0
    %363 = vmatprep.subr.mxu0 0.0
    %364 = vmatpush2.msra.mxu0 0.0
    %365 = vmatprep.subr.mxu0 0.0
    %366 = vmatpush2.msra.mxu0 0.0
    %367 = vmatprep.subr.mxu0 0.0
    %368 = vmatpush2.msra.mxu0 0.0
    %369 = vmatprep.subr.mxu0 0.0
    %370 = vmatpush2.msra.mxu0 0.0
    %371 = vmatprep.subr.mxu0 0.0
    %372 = vmatpush2.msra.mxu0 0.0
    %373 = vmatprep.subr.mxu0 0.0
    %374 = vmatpush2.msra.mxu0 0.0
    %375 = vmatprep.subr.mxu0 0.0
    %376 = vmatpush2.msra.mxu0 0.0
    %377 = vmatprep.subr.mxu0 0.0
    %378 = vmatpush2.msra.mxu0 0.0
    %379 = vmatprep.subr.mxu0 0.0
    %380 = vmatpush2.msra.mxu0 0.0
    %381 = vmatprep.mubr.f32.mxu0 0.0
    %382 = vmatmul.mubr.f32.gmra.mxu0 %v87
    %v383 = vpop.f32.mrf.mxu0
    %v384 = vadd.f32 0.0, %v383
    %v385 = vpop.f32.mrf.mxu0
    %386 = vmatprep.mubr.f32.mxu0 0.0
    %387 = vmatmul.mubr.f32.gmra.mxu0 %v90
    %v388 = vpop.f32.mrf.mxu0
    %v389 = vadd.f32 0.0, %v388
    %v390 = vpop.f32.mrf.mxu0
    %391 = vdwg.mxu0
    %s392 = scalar_lea.vmem %s3, 128
    %v393 = vld [vmem:[%s392] sm:$0xff]
    %v394 = vld [vmem:[%s392 + $0x8] sm:$0xff]
    %v395 = vld [vmem:[%s392 + $0x10] sm:$0xff]
    %v396 = vld [vmem:[%s392 + $0x18] sm:$0xff]
    %v397 = vld [vmem:[%s392 + $0x20] sm:$0xff]
    %v398 = vld [vmem:[%s392 + $0x28] sm:$0xff]
    %v399 = vld [vmem:[%s392 + $0x30] sm:$0xff]
    %v400 = vld [vmem:[%s392 + $0x38] sm:$0xff]
    %v401 = vld [vmem:[%s392 + $0x40] sm:$0xff]
    %v402 = vld [vmem:[%s392 + $0x48] sm:$0xff]
    %v403 = vld [vmem:[%s392 + $0x50] sm:$0xff]
    %v404 = vld [vmem:[%s392 + $0x58] sm:$0xff]
    %v405 = vld [vmem:[%s392 + $0x60] sm:$0xff]
    %v406 = vld [vmem:[%s392 + $0x68] sm:$0xff]
    %v407 = vld [vmem:[%s392 + $0x70] sm:$0xff]
    %v408 = vld [vmem:[%s392 + $0x78] sm:$0xff]
    %409 = vmatprep.subr.mxu0 0.0
    %410 = vmatpush1.msra.mxu0 0.0
    %411 = vmatprep.subr.mxu0 0.0
    %412 = vmatpush1.msra.mxu0 0.0
    %413 = vmatprep.subr.mxu0 0.0
    %414 = vmatpush1.msra.mxu0 0.0
    %415 = vmatprep.subr.mxu0 0.0
    %416 = vmatpush1.msra.mxu0 0.0
    %417 = vmatprep.subr.mxu0 0.0
    %418 = vmatpush1.msra.mxu0 0.0
    %419 = vmatprep.subr.mxu0 0.0
    %420 = vmatpush1.msra.mxu0 0.0
    %421 = vmatprep.subr.mxu0 0.0
    %422 = vmatpush1.msra.mxu0 0.0
    %423 = vmatprep.subr.mxu0 0.0
    %424 = vmatpush1.msra.mxu0 0.0
    %425 = vmatprep.subr.mxu0 0.0
    %426 = vmatpush1.msra.mxu0 0.0
    %427 = vmatprep.subr.mxu0 0.0
    %428 = vmatpush1.msra.mxu0 0.0
    %429 = vmatprep.subr.mxu0 0.0
    %430 = vmatpush1.msra.mxu0 0.0
    %431 = vmatprep.subr.mxu0 0.0
    %432 = vmatpush1.msra.mxu0 0.0
    %433 = vmatprep.subr.mxu0 0.0
    %434 = vmatpush1.msra.mxu0 %v396
    %435 = vmatprep.subr.mxu0 0.0
    %436 = vmatpush1.msra.mxu0 %v395
    %437 = vmatprep.subr.mxu0 0.0
    %438 = vmatpush1.msra.mxu0 %v394
    %439 = vmatprep.subr.mxu0 0.0
    %440 = vmatpush1.msra.mxu0 %v393
    %441 = vmatprep.subr.mxu0 0.0
    %442 = vmatpush2.msra.mxu0 0.0
    %443 = vmatprep.subr.mxu0 0.0
    %444 = vmatpush2.msra.mxu0 0.0
    %445 = vmatprep.subr.mxu0 0.0
    %446 = vmatpush2.msra.mxu0 0.0
    %447 = vmatprep.subr.mxu0 0.0
    %448 = vmatpush2.msra.mxu0 0.0
    %449 = vmatprep.subr.mxu0 0.0
    %450 = vmatpush2.msra.mxu0 0.0
    %451 = vmatprep.subr.mxu0 0.0
    %452 = vmatpush2.msra.mxu0 0.0
    %453 = vmatprep.subr.mxu0 0.0
    %454 = vmatpush2.msra.mxu0 0.0
    %455 = vmatprep.subr.mxu0 0.0
    %456 = vmatpush2.msra.mxu0 0.0
    %457 = vmatprep.subr.mxu0 0.0
    %458 = vmatpush2.msra.mxu0 0.0
    %459 = vmatprep.subr.mxu0 0.0
    %460 = vmatpush2.msra.mxu0 0.0
    %461 = vmatprep.subr.mxu0 0.0
    %462 = vmatpush2.msra.mxu0 0.0
    %463 = vmatprep.subr.mxu0 0.0
    %464 = vmatpush2.msra.mxu0 0.0
    %465 = vmatprep.subr.mxu0 0.0
    %466 = vmatpush2.msra.mxu0 0.0
    %467 = vmatprep.subr.mxu0 0.0
    %468 = vmatpush2.msra.mxu0 0.0
    %469 = vmatprep.subr.mxu0 0.0
    %470 = vmatpush2.msra.mxu0 0.0
    %471 = vmatprep.subr.mxu0 0.0
    %472 = vmatpush2.msra.mxu0 0.0
    %473 = vmatprep.mubr.f32.mxu0 0.0
    %474 = vmatmul.mubr.f32.gmra.mxu0 %v87
    %v475 = vpop.f32.mrf.mxu0
    %v476 = vadd.f32 0.0, %v475
    %v477 = vpop.f32.mrf.mxu0
    %478 = vmatprep.mubr.f32.mxu0 0.0
    %479 = vmatmul.mubr.f32.gmra.mxu0 %v90
    %v480 = vpop.f32.mrf.mxu0
    %v481 = vadd.f32 0.0, %v480
    %v482 = vpop.f32.mrf.mxu0
    %483 = vdwg.mxu0
    %484 = vmatprep.subr.mxu0 0.0
    %485 = vmatpush1.msra.mxu0 0.0
    %486 = vmatprep.subr.mxu0 0.0
    %487 = vmatpush1.msra.mxu0 0.0
    %488 = vmatprep.subr.mxu0 0.0
    %489 = vmatpush1.msra.mxu0 0.0
    %490 = vmatprep.subr.mxu0 0.0
    %491 = vmatpush1.msra.mxu0 0.0
    %492 = vmatprep.subr.mxu0 0.0
    %493 = vmatpush1.msra.mxu0 0.0
    %494 = vmatprep.subr.mxu0 0.0
    %495 = vmatpush1.msra.mxu0 0.0
    %496 = vmatprep.subr.mxu0 0.0
    %497 = vmatpush1.msra.mxu0 0.0
    %498 = vmatprep.subr.mxu0 0.0
    %499 = vmatpush1.msra.mxu0 0.0
    %500 = vmatprep.subr.mxu0 0.0
    %501 = vmatpush1.msra.mxu0 0.0
    %502 = vmatprep.subr.mxu0 0.0
    %503 = vmatpush1.msra.mxu0 0.0
    %504 = vmatprep.subr.mxu0 0.0
    %505 = vmatpush1.msra.mxu0 0.0
    %506 = vmatprep.subr.mxu0 0.0
    %507 = vmatpush1.msra.mxu0 0.0
    %508 = vmatprep.subr.mxu0 0.0
    %509 = vmatpush1.msra.mxu0 %v400
    %510 = vmatprep.subr.mxu0 0.0
    %511 = vmatpush1.msra.mxu0 %v399
    %512 = vmatprep.subr.mxu0 0.0
    %513 = vmatpush1.msra.mxu0 %v398
    %514 = vmatprep.subr.mxu0 0.0
    %515 = vmatpush1.msra.mxu0 %v397
    %516 = vmatprep.subr.mxu0 0.0
    %517 = vmatpush2.msra.mxu0 0.0
    %518 = vmatprep.subr.mxu0 0.0
    %519 = vmatpush2.msra.mxu0 0.0
    %520 = vmatprep.subr.mxu0 0.0
    %521 = vmatpush2.msra.mxu0 0.0
    %522 = vmatprep.subr.mxu0 0.0
    %523 = vmatpush2.msra.mxu0 0.0
    %524 = vmatprep.subr.mxu0 0.0
    %525 = vmatpush2.msra.mxu0 0.0
    %526 = vmatprep.subr.mxu0 0.0
    %527 = vmatpush2.msra.mxu0 0.0
    %528 = vmatprep.subr.mxu0 0.0
    %529 = vmatpush2.msra.mxu0 0.0
    %530 = vmatprep.subr.mxu0 0.0
    %531 = vmatpush2.msra.mxu0 0.0
    %532 = vmatprep.subr.mxu0 0.0
    %533 = vmatpush2.msra.mxu0 0.0
    %534 = vmatprep.subr.mxu0 0.0
    %535 = vmatpush2.msra.mxu0 0.0
    %536 = vmatprep.subr.mxu0 0.0
    %537 = vmatpush2.msra.mxu0 0.0
    %538 = vmatprep.subr.mxu0 0.0
    %539 = vmatpush2.msra.mxu0 0.0
    %540 = vmatprep.subr.mxu0 0.0
    %541 = vmatpush2.msra.mxu0 0.0
    %542 = vmatprep.subr.mxu0 0.0
    %543 = vmatpush2.msra.mxu0 0.0
    %544 = vmatprep.subr.mxu0 0.0
    %545 = vmatpush2.msra.mxu0 0.0
    %546 = vmatprep.subr.mxu0 0.0
    %547 = vmatpush2.msra.mxu0 0.0
    %548 = vmatprep.mubr.f32.mxu0 0.0
    %549 = vmatmul.mubr.f32.gmra.mxu0 %v87
    %v550 = vpop.f32.mrf.mxu0
    %v551 = vadd.f32 0.0, %v550
    %v552 = vpop.f32.mrf.mxu0
    %553 = vmatprep.mubr.f32.mxu0 0.0
    %554 = vmatmul.mubr.f32.gmra.mxu0 %v90
    %v555 = vpop.f32.mrf.mxu0
    %v556 = vadd.f32 0.0, %v555
    %v557 = vpop.f32.mrf.mxu0
    %558 = vdwg.mxu0
    %559 = vmatprep.subr.mxu0 0.0
    %560 = vmatpush1.msra.mxu0 0.0
    %561 = vmatprep.subr.mxu0 0.0
    %562 = vmatpush1.msra.mxu0 0.0
    %563 = vmatprep.subr.mxu0 0.0
    %564 = vmatpush1.msra.mxu0 0.0
    %565 = vmatprep.subr.mxu0 0.0
    %566 = vmatpush1.msra.mxu0 0.0
    %567 = vmatprep.subr.mxu0 0.0
    %568 = vmatpush1.msra.mxu0 0.0
    %569 = vmatprep.subr.mxu0 0.0
    %570 = vmatpush1.msra.mxu0 0.0
    %571 = vmatprep.subr.mxu0 0.0
    %572 = vmatpush1.msra.mxu0 0.0
    %573 = vmatprep.subr.mxu0 0.0
    %574 = vmatpush1.msra.mxu0 0.0
    %575 = vmatprep.subr.mxu0 0.0
    %576 = vmatpush1.msra.mxu0 0.0
    %577 = vmatprep.subr.mxu0 0.0
    %578 = vmatpush1.msra.mxu0 0.0
    %579 = vmatprep.subr.mxu0 0.0
    %580 = vmatpush1.msra.mxu0 0.0
    %581 = vmatprep.subr.mxu0 0.0
    %582 = vmatpush1.msra.mxu0 0.0
    %583 = vmatprep.subr.mxu0 0.0
    %584 = vmatpush1.msra.mxu0 %v404
    %585 = vmatprep.subr.mxu0 0.0
    %586 = vmatpush1.msra.mxu0 %v403
    %587 = vmatprep.subr.mxu0 0.0
    %588 = vmatpush1.msra.mxu0 %v402
    %589 = vmatprep.subr.mxu0 0.0
    %590 = vmatpush1.msra.mxu0 %v401
    %591 = vmatprep.subr.mxu0 0.0
    %592 = vmatpush2.msra.mxu0 0.0
    %593 = vmatprep.subr.mxu0 0.0
    %594 = vmatpush2.msra.mxu0 0.0
    %595 = vmatprep.subr.mxu0 0.0
    %596 = vmatpush2.msra.mxu0 0.0
    %597 = vmatprep.subr.mxu0 0.0
    %598 = vmatpush2.msra.mxu0 0.0
    %599 = vmatprep.subr.mxu0 0.0
    %600 = vmatpush2.msra.mxu0 0.0
    %601 = vmatprep.subr.mxu0 0.0
    %602 = vmatpush2.msra.mxu0 0.0
    %603 = vmatprep.subr.mxu0 0.0
    %604 = vmatpush2.msra.mxu0 0.0
    %605 = vmatprep.subr.mxu0 0.0
    %606 = vmatpush2.msra.mxu0 0.0
    %607 = vmatprep.subr.mxu0 0.0
    %608 = vmatpush2.msra.mxu0 0.0
    %609 = vmatprep.subr.mxu0 0.0
    %610 = vmatpush2.msra.mxu0 0.0
    %611 = vmatprep.subr.mxu0 0.0
    %612 = vmatpush2.msra.mxu0 0.0
    %613 = vmatprep.subr.mxu0 0.0
    %614 = vmatpush2.msra.mxu0 0.0
    %615 = vmatprep.subr.mxu0 0.0
    %616 = vmatpush2.msra.mxu0 0.0
    %617 = vmatprep.subr.mxu0 0.0
    %618 = vmatpush2.msra.mxu0 0.0
    %619 = vmatprep.subr.mxu0 0.0
    %620 = vmatpush2.msra.mxu0 0.0
    %621 = vmatprep.subr.mxu0 0.0
    %622 = vmatpush2.msra.mxu0 0.0
    %623 = vmatprep.mubr.f32.mxu0 0.0
    %624 = vmatmul.mubr.f32.gmra.mxu0 %v87
    %v625 = vpop.f32.mrf.mxu0
    %v626 = vadd.f32 0.0, %v625
    %v627 = vpop.f32.mrf.mxu0
    %628 = vmatprep.mubr.f32.mxu0 0.0
    %629 = vmatmul.mubr.f32.gmra.mxu0 %v90
    %v630 = vpop.f32.mrf.mxu0
    %v631 = vadd.f32 0.0, %v630
    %v632 = vpop.f32.mrf.mxu0
    %633 = vdwg.mxu0
    %634 = vmatprep.subr.mxu0 0.0
    %635 = vmatpush1.msra.mxu0 0.0
    %636 = vmatprep.subr.mxu0 0.0
    %637 = vmatpush1.msra.mxu0 0.0
    %638 = vmatprep.subr.mxu0 0.0
    %639 = vmatpush1.msra.mxu0 0.0
    %640 = vmatprep.subr.mxu0 0.0
    %641 = vmatpush1.msra.mxu0 0.0
    %642 = vmatprep.subr.mxu0 0.0
    %643 = vmatpush1.msra.mxu0 0.0
    %644 = vmatprep.subr.mxu0 0.0
    %645 = vmatpush1.msra.mxu0 0.0
    %646 = vmatprep.subr.mxu0 0.0
    %647 = vmatpush1.msra.mxu0 0.0
    %648 = vmatprep.subr.mxu0 0.0
    %649 = vmatpush1.msra.mxu0 0.0
    %650 = vmatprep.subr.mxu0 0.0
    %651 = vmatpush1.msra.mxu0 0.0
    %652 = vmatprep.subr.mxu0 0.0
    %653 = vmatpush1.msra.mxu0 0.0
    %654 = vmatprep.subr.mxu0 0.0
    %655 = vmatpush1.msra.mxu0 0.0
    %656 = vmatprep.subr.mxu0 0.0
    %657 = vmatpush1.msra.mxu0 0.0
    %658 = vmatprep.subr.mxu0 0.0
    %659 = vmatpush1.msra.mxu0 %v408
    %660 = vmatprep.subr.mxu0 0.0
    %661 = vmatpush1.msra.mxu0 %v407
    %662 = vmatprep.subr.mxu0 0.0
    %663 = vmatpush1.msra.mxu0 %v406
    %664 = vmatprep.subr.mxu0 0.0
    %665 = vmatpush1.msra.mxu0 %v405
    %666 = vmatprep.subr.mxu0 0.0
    %667 = vmatpush2.msra.mxu0 0.0
    %668 = vmatprep.subr.mxu0 0.0
    %669 = vmatpush2.msra.mxu0 0.0
    %670 = vmatprep.subr.mxu0 0.0
    %671 = vmatpush2.msra.mxu0 0.0
    %672 = vmatprep.subr.mxu0 0.0
    %673 = vmatpush2.msra.mxu0 0.0
    %674 = vmatprep.subr.mxu0 0.0
    %675 = vmatpush2.msra.mxu0 0.0
    %676 = vmatprep.subr.mxu0 0.0
    %677 = vmatpush2.msra.mxu0 0.0
    %678 = vmatprep.subr.mxu0 0.0
    %679 = vmatpush2.msra.mxu0 0.0
    %680 = vmatprep.subr.mxu0 0.0
    %681 = vmatpush2.msra.mxu0 0.0
    %682 = vmatprep.subr.mxu0 0.0
    %683 = vmatpush2.msra.mxu0 0.0
    %684 = vmatprep.subr.mxu0 0.0
    %685 = vmatpush2.msra.mxu0 0.0
    %686 = vmatprep.subr.mxu0 0.0
    %687 = vmatpush2.msra.mxu0 0.0
    %688 = vmatprep.subr.mxu0 0.0
    %689 = vmatpush2.msra.mxu0 0.0
    %690 = vmatprep.subr.mxu0 0.0
    %691 = vmatpush2.msra.mxu0 0.0
    %692 = vmatprep.subr.mxu0 0.0
    %693 = vmatpush2.msra.mxu0 0.0
    %694 = vmatprep.subr.mxu0 0.0
    %695 = vmatpush2.msra.mxu0 0.0
    %696 = vmatprep.subr.mxu0 0.0
    %697 = vmatpush2.msra.mxu0 0.0
    %698 = vmatprep.mubr.f32.mxu0 0.0
    %699 = vmatmul.mubr.f32.gmra.mxu0 %v87
    %v700 = vpop.f32.mrf.mxu0
    %v701 = vadd.f32 0.0, %v700
    %v702 = vpop.f32.mrf.mxu0
    %703 = vmatprep.mubr.f32.mxu0 0.0
    %704 = vmatmul.mubr.f32.gmra.mxu0 %v90
    %v705 = vpop.f32.mrf.mxu0
    %v706 = vadd.f32 0.0, %v705
    %v707 = vpop.f32.mrf.mxu0
    %708 = vdwg.mxu0
    %s709 = scalar_lea.vmem %s3, 256
    %v710 = vld [vmem:[%s709] sm:$0xff]
    %v711 = vld [vmem:[%s709 + $0x8] sm:$0xff]
    %v712 = vld [vmem:[%s709 + $0x10] sm:$0xff]
    %v713 = vld [vmem:[%s709 + $0x18] sm:$0xff]
    %v714 = vld [vmem:[%s709 + $0x20] sm:$0xff]
    %v715 = vld [vmem:[%s709 + $0x28] sm:$0xff]
    %v716 = vld [vmem:[%s709 + $0x30] sm:$0xff]
    %v717 = vld [vmem:[%s709 + $0x38] sm:$0xff]
    %v718 = vld [vmem:[%s709 + $0x40] sm:$0xff]
    %v719 = vld [vmem:[%s709 + $0x48] sm:$0xff]
    %v720 = vld [vmem:[%s709 + $0x50] sm:$0xff]
    %v721 = vld [vmem:[%s709 + $0x58] sm:$0xff]
    %v722 = vld [vmem:[%s709 + $0x60] sm:$0xff]
    %v723 = vld [vmem:[%s709 + $0x68] sm:$0xff]
    %v724 = vld [vmem:[%s709 + $0x70] sm:$0xff]
    %v725 = vld [vmem:[%s709 + $0x78] sm:$0xff]
    %726 = vmatprep.subr.mxu0 0.0
    %727 = vmatpush1.msra.mxu0 0.0
    %728 = vmatprep.subr.mxu0 0.0
    %729 = vmatpush1.msra.mxu0 0.0
    %730 = vmatprep.subr.mxu0 0.0
    %731 = vmatpush1.msra.mxu0 0.0
    %732 = vmatprep.subr.mxu0 0.0
    %733 = vmatpush1.msra.mxu0 0.0
    %734 = vmatprep.subr.mxu0 0.0
    %735 = vmatpush1.msra.mxu0 0.0
    %736 = vmatprep.subr.mxu0 0.0
    %737 = vmatpush1.msra.mxu0 0.0
    %738 = vmatprep.subr.mxu0 0.0
    %739 = vmatpush1.msra.mxu0 0.0
    %740 = vmatprep.subr.mxu0 0.0
    %741 = vmatpush1.msra.mxu0 0.0
    %742 = vmatprep.subr.mxu0 0.0
    %743 = vmatpush1.msra.mxu0 0.0
    %744 = vmatprep.subr.mxu0 0.0
    %745 = vmatpush1.msra.mxu0 0.0
    %746 = vmatprep.subr.mxu0 0.0
    %747 = vmatpush1.msra.mxu0 0.0
    %748 = vmatprep.subr.mxu0 0.0
    %749 = vmatpush1.msra.mxu0 0.0
    %750 = vmatprep.subr.mxu0 0.0
    %751 = vmatpush1.msra.mxu0 %v713
    %752 = vmatprep.subr.mxu0 0.0
    %753 = vmatpush1.msra.mxu0 %v712
    %754 = vmatprep.subr.mxu0 0.0
    %755 = vmatpush1.msra.mxu0 %v711
    %756 = vmatprep.subr.mxu0 0.0
    %757 = vmatpush1.msra.mxu0 %v710
    %758 = vmatprep.subr.mxu0 0.0
    %759 = vmatpush2.msra.mxu0 0.0
    %760 = vmatprep.subr.mxu0 0.0
    %761 = vmatpush2.msra.mxu0 0.0
    %762 = vmatprep.subr.mxu0 0.0
    %763 = vmatpush2.msra.mxu0 0.0
    %764 = vmatprep.subr.mxu0 0.0
    %765 = vmatpush2.msra.mxu0 0.0
    %766 = vmatprep.subr.mxu0 0.0
    %767 = vmatpush2.msra.mxu0 0.0
    %768 = vmatprep.subr.mxu0 0.0
    %769 = vmatpush2.msra.mxu0 0.0
    %770 = vmatprep.subr.mxu0 0.0
    %771 = vmatpush2.msra.mxu0 0.0
    %772 = vmatprep.subr.mxu0 0.0
    %773 = vmatpush2.msra.mxu0 0.0
    %774 = vmatprep.subr.mxu0 0.0
    %775 = vmatpush2.msra.mxu0 0.0
    %776 = vmatprep.subr.mxu0 0.0
    %777 = vmatpush2.msra.mxu0 0.0
    %778 = vmatprep.subr.mxu0 0.0
    %779 = vmatpush2.msra.mxu0 0.0
    %780 = vmatprep.subr.mxu0 0.0
    %781 = vmatpush2.msra.mxu0 0.0
    %782 = vmatprep.subr.mxu0 0.0
    %783 = vmatpush2.msra.mxu0 0.0
    %784 = vmatprep.subr.mxu0 0.0
    %785 = vmatpush2.msra.mxu0 0.0
    %786 = vmatprep.subr.mxu0 0.0
    %787 = vmatpush2.msra.mxu0 0.0
    %788 = vmatprep.subr.mxu0 0.0
    %789 = vmatpush2.msra.mxu0 0.0
    %790 = vmatprep.mubr.f32.mxu0 0.0
    %791 = vmatmul.mubr.f32.gmra.mxu0 %v87
    %v792 = vpop.f32.mrf.mxu0
    %v793 = vadd.f32 0.0, %v792
    %v794 = vpop.f32.mrf.mxu0
    %795 = vmatprep.mubr.f32.mxu0 0.0
    %796 = vmatmul.mubr.f32.gmra.mxu0 %v90
    %v797 = vpop.f32.mrf.mxu0
    %v798 = vadd.f32 0.0, %v797
    %v799 = vpop.f32.mrf.mxu0
    %800 = vdwg.mxu0
    %801 = vmatprep.subr.mxu0 0.0
    %802 = vmatpush1.msra.mxu0 0.0
    %803 = vmatprep.subr.mxu0 0.0
    %804 = vmatpush1.msra.mxu0 0.0
    %805 = vmatprep.subr.mxu0 0.0
    %806 = vmatpush1.msra.mxu0 0.0
    %807 = vmatprep.subr.mxu0 0.0
    %808 = vmatpush1.msra.mxu0 0.0
    %809 = vmatprep.subr.mxu0 0.0
    %810 = vmatpush1.msra.mxu0 0.0
    %811 = vmatprep.subr.mxu0 0.0
    %812 = vmatpush1.msra.mxu0 0.0
    %813 = vmatprep.subr.mxu0 0.0
    %814 = vmatpush1.msra.mxu0 0.0
    %815 = vmatprep.subr.mxu0 0.0
    %816 = vmatpush1.msra.mxu0 0.0
    %817 = vmatprep.subr.mxu0 0.0
    %818 = vmatpush1.msra.mxu0 0.0
    %819 = vmatprep.subr.mxu0 0.0
    %820 = vmatpush1.msra.mxu0 0.0
    %821 = vmatprep.subr.mxu0 0.0
    %822 = vmatpush1.msra.mxu0 0.0
    %823 = vmatprep.subr.mxu0 0.0
    %824 = vmatpush1.msra.mxu0 0.0
    %825 = vmatprep.subr.mxu0 0.0
    %826 = vmatpush1.msra.mxu0 %v717
    %827 = vmatprep.subr.mxu0 0.0
    %828 = vmatpush1.msra.mxu0 %v716
    %829 = vmatprep.subr.mxu0 0.0
    %830 = vmatpush1.msra.mxu0 %v715
    %831 = vmatprep.subr.mxu0 0.0
    %832 = vmatpush1.msra.mxu0 %v714
    %833 = vmatprep.subr.mxu0 0.0
    %834 = vmatpush2.msra.mxu0 0.0
    %835 = vmatprep.subr.mxu0 0.0
    %836 = vmatpush2.msra.mxu0 0.0
    %837 = vmatprep.subr.mxu0 0.0
    %838 = vmatpush2.msra.mxu0 0.0
    %839 = vmatprep.subr.mxu0 0.0
    %840 = vmatpush2.msra.mxu0 0.0
    %841 = vmatprep.subr.mxu0 0.0
    %842 = vmatpush2.msra.mxu0 0.0
    %843 = vmatprep.subr.mxu0 0.0
    %844 = vmatpush2.msra.mxu0 0.0
    %845 = vmatprep.subr.mxu0 0.0
    %846 = vmatpush2.msra.mxu0 0.0
    %847 = vmatprep.subr.mxu0 0.0
    %848 = vmatpush2.msra.mxu0 0.0
    %849 = vmatprep.subr.mxu0 0.0
    %850 = vmatpush2.msra.mxu0 0.0
    %851 = vmatprep.subr.mxu0 0.0
    %852 = vmatpush2.msra.mxu0 0.0
    %853 = vmatprep.subr.mxu0 0.0
    %854 = vmatpush2.msra.mxu0 0.0
    %855 = vmatprep.subr.mxu0 0.0
    %856 = vmatpush2.msra.mxu0 0.0
    %857 = vmatprep.subr.mxu0 0.0
    %858 = vmatpush2.msra.mxu0 0.0
    %859 = vmatprep.subr.mxu0 0.0
    %860 = vmatpush2.msra.mxu0 0.0
    %861 = vmatprep.subr.mxu0 0.0
    %862 = vmatpush2.msra.mxu0 0.0
    %863 = vmatprep.subr.mxu0 0.0
    %864 = vmatpush2.msra.mxu0 0.0
    %865 = vmatprep.mubr.f32.mxu0 0.0
    %866 = vmatmul.mubr.f32.gmra.mxu0 %v87
    %v867 = vpop.f32.mrf.mxu0
    %v868 = vadd.f32 0.0, %v867
    %v869 = vpop.f32.mrf.mxu0
    %870 = vmatprep.mubr.f32.mxu0 0.0
    %871 = vmatmul.mubr.f32.gmra.mxu0 %v90
    %v872 = vpop.f32.mrf.mxu0
    %v873 = vadd.f32 0.0, %v872
    %v874 = vpop.f32.mrf.mxu0
    %875 = vdwg.mxu0
    %876 = vmatprep.subr.mxu0 0.0
    %877 = vmatpush1.msra.mxu0 0.0
    %878 = vmatprep.subr.mxu0 0.0
    %879 = vmatpush1.msra.mxu0 0.0
    %880 = vmatprep.subr.mxu0 0.0
    %881 = vmatpush1.msra.mxu0 0.0
    %882 = vmatprep.subr.mxu0 0.0
    %883 = vmatpush1.msra.mxu0 0.0
    %884 = vmatprep.subr.mxu0 0.0
    %885 = vmatpush1.msra.mxu0 0.0
    %886 = vmatprep.subr.mxu0 0.0
    %887 = vmatpush1.msra.mxu0 0.0
    %888 = vmatprep.subr.mxu0 0.0
    %889 = vmatpush1.msra.mxu0 0.0
    %890 = vmatprep.subr.mxu0 0.0
    %891 = vmatpush1.msra.mxu0 0.0
    %892 = vmatprep.subr.mxu0 0.0
    %893 = vmatpush1.msra.mxu0 0.0
    %894 = vmatprep.subr.mxu0 0.0
    %895 = vmatpush1.msra.mxu0 0.0
    %896 = vmatprep.subr.mxu0 0.0
    %897 = vmatpush1.msra.mxu0 0.0
    %898 = vmatprep.subr.mxu0 0.0
    %899 = vmatpush1.msra.mxu0 0.0
    %900 = vmatprep.subr.mxu0 0.0
    %901 = vmatpush1.msra.mxu0 %v721
    %902 = vmatprep.subr.mxu0 0.0
    %903 = vmatpush1.msra.mxu0 %v720
    %904 = vmatprep.subr.mxu0 0.0
    %905 = vmatpush1.msra.mxu0 %v719
    %906 = vmatprep.subr.mxu0 0.0
    %907 = vmatpush1.msra.mxu0 %v718
    %908 = vmatprep.subr.mxu0 0.0
    %909 = vmatpush2.msra.mxu0 0.0
    %910 = vmatprep.subr.mxu0 0.0
    %911 = vmatpush2.msra.mxu0 0.0
    %912 = vmatprep.subr.mxu0 0.0
    %913 = vmatpush2.msra.mxu0 0.0
    %914 = vmatprep.subr.mxu0 0.0
    %915 = vmatpush2.msra.mxu0 0.0
    %916 = vmatprep.subr.mxu0 0.0
    %917 = vmatpush2.msra.mxu0 0.0
    %918 = vmatprep.subr.mxu0 0.0
    %919 = vmatpush2.msra.mxu0 0.0
    %920 = vmatprep.subr.mxu0 0.0
    %921 = vmatpush2.msra.mxu0 0.0
    %922 = vmatprep.subr.mxu0 0.0
    %923 = vmatpush2.msra.mxu0 0.0
    %924 = vmatprep.subr.mxu0 0.0
    %925 = vmatpush2.msra.mxu0 0.0
    %926 = vmatprep.subr.mxu0 0.0
    %927 = vmatpush2.msra.mxu0 0.0
    %928 = vmatprep.subr.mxu0 0.0
    %929 = vmatpush2.msra.mxu0 0.0
    %930 = vmatprep.subr.mxu0 0.0
    %931 = vmatpush2.msra.mxu0 0.0
    %932 = vmatprep.subr.mxu0 0.0
    %933 = vmatpush2.msra.mxu0 0.0
    %934 = vmatprep.subr.mxu0 0.0
    %935 = vmatpush2.msra.mxu0 0.0
    %936 = vmatprep.subr.mxu0 0.0
    %937 = vmatpush2.msra.mxu0 0.0
    %938 = vmatprep.subr.mxu0 0.0
    %939 = vmatpush2.msra.mxu0 0.0
    %940 = vmatprep.mubr.f32.mxu0 0.0
    %941 = vmatmul.mubr.f32.gmra.mxu0 %v87
    %v942 = vpop.f32.mrf.mxu0
    %v943 = vadd.f32 0.0, %v942
    %v944 = vpop.f32.mrf.mxu0
    %945 = vmatprep.mubr.f32.mxu0 0.0
    %946 = vmatmul.mubr.f32.gmra.mxu0 %v90
    %v947 = vpop.f32.mrf.mxu0
    %v948 = vadd.f32 0.0, %v947
    %v949 = vpop.f32.mrf.mxu0
    %950 = vdwg.mxu0
    %951 = vmatprep.subr.mxu0 0.0
    %952 = vmatpush1.msra.mxu0 0.0
    %953 = vmatprep.subr.mxu0 0.0
    %954 = vmatpush1.msra.mxu0 0.0
    %955 = vmatprep.subr.mxu0 0.0
    %956 = vmatpush1.msra.mxu0 0.0
    %957 = vmatprep.subr.mxu0 0.0
    %958 = vmatpush1.msra.mxu0 0.0
    %959 = vmatprep.subr.mxu0 0.0
    %960 = vmatpush1.msra.mxu0 0.0
    %961 = vmatprep.subr.mxu0 0.0
    %962 = vmatpush1.msra.mxu0 0.0
    %963 = vmatprep.subr.mxu0 0.0
    %964 = vmatpush1.msra.mxu0 0.0
    %965 = vmatprep.subr.mxu0 0.0
    %966 = vmatpush1.msra.mxu0 0.0
    %967 = vmatprep.subr.mxu0 0.0
    %968 = vmatpush1.msra.mxu0 0.0
    %969 = vmatprep.subr.mxu0 0.0
    %970 = vmatpush1.msra.mxu0 0.0
    %971 = vmatprep.subr.mxu0 0.0
    %972 = vmatpush1.msra.mxu0 0.0
    %973 = vmatprep.subr.mxu0 0.0
    %974 = vmatpush1.msra.mxu0 0.0
    %975 = vmatprep.subr.mxu0 0.0
    %976 = vmatpush1.msra.mxu0 %v725
    %977 = vmatprep.subr.mxu0 0.0
    %978 = vmatpush1.msra.mxu0 %v724
    %979 = vmatprep.subr.mxu0 0.0
    %980 = vmatpush1.msra.mxu0 %v723
    %981 = vmatprep.subr.mxu0 0.0
    %982 = vmatpush1.msra.mxu0 %v722
    %983 = vmatprep.subr.mxu0 0.0
    %984 = vmatpush2.msra.mxu0 0.0
    %985 = vmatprep.subr.mxu0 0.0
    %986 = vmatpush2.msra.mxu0 0.0
    %987 = vmatprep.subr.mxu0 0.0
    %988 = vmatpush2.msra.mxu0 0.0
    %989 = vmatprep.subr.mxu0 0.0
    %990 = vmatpush2.msra.mxu0 0.0
    %991 = vmatprep.subr.mxu0 0.0
    %992 = vmatpush2.msra.mxu0 0.0
    %993 = vmatprep.subr.mxu0 0.0
    %994 = vmatpush2.msra.mxu0 0.0
    %995 = vmatprep.subr.mxu0 0.0
    %996 = vmatpush2.msra.mxu0 0.0
    %997 = vmatprep.subr.mxu0 0.0
    %998 = vmatpush2.msra.mxu0 0.0
    %999 = vmatprep.subr.mxu0 0.0
    %1000 = vmatpush2.msra.mxu0 0.0
    %1001 = vmatprep.subr.mxu0 0.0
    %1002 = vmatpush2.msra.mxu0 0.0
    %1003 = vmatprep.subr.mxu0 0.0
    %1004 = vmatpush2.msra.mxu0 0.0
    %1005 = vmatprep.subr.mxu0 0.0
    %1006 = vmatpush2.msra.mxu0 0.0
    %1007 = vmatprep.subr.mxu0 0.0
    %1008 = vmatpush2.msra.mxu0 0.0
    %1009 = vmatprep.subr.mxu0 0.0
    %1010 = vmatpush2.msra.mxu0 0.0
    %1011 = vmatprep.subr.mxu0 0.0
    %1012 = vmatpush2.msra.mxu0 0.0
    %1013 = vmatprep.subr.mxu0 0.0
    %1014 = vmatpush2.msra.mxu0 0.0
    %1015 = vmatprep.mubr.f32.mxu0 0.0
    %1016 = vmatmul.mubr.f32.gmra.mxu0 %v87
    %v1017 = vpop.f32.mrf.mxu0
    %v1018 = vadd.f32 0.0, %v1017
    %v1019 = vpop.f32.mrf.mxu0
    %1020 = vmatprep.mubr.f32.mxu0 0.0
    %1021 = vmatmul.mubr.f32.gmra.mxu0 %v90
    %v1022 = vpop.f32.mrf.mxu0
    %v1023 = vadd.f32 0.0, %v1022
    %v1024 = vpop.f32.mrf.mxu0
    %1025 = vdwg.mxu0
    %vm1026 = vcmask 64512
    %v1028 = vsel %vm1026, %v159, 0
    %v1031 = vsel %vm1026, %v476, 0
    %1033 = vmatprep.subr.mxu0 0.0
    %1034 = vmatpush1.xpose.msra.mxu0 0.0
    %1035 = vmatprep.subr.mxu0 0.0
    %1036 = vmatpush1.xpose.msra.mxu0 0.0
    %1037 = vmatprep.subr.mxu0 0.0
    %1038 = vmatpush1.xpose.msra.mxu0 0.0
    %1039 = vmatprep.subr.mxu0 0.0
    %1040 = vmatpush1.xpose.msra.mxu0 0.0
    %1041 = vmatprep.subr.mxu0 0.0
    %1042 = vmatpush1.xpose.msra.mxu0 0.0
    %1043 = vmatprep.subr.mxu0 0.0
    %1044 = vmatpush1.xpose.msra.mxu0 0.0
    %1045 = vmatprep.subr.mxu0 0.0
    %1046 = vmatpush1.xpose.msra.mxu0 0.0
    %1047 = vmatprep.subr.mxu0 0.0
    %1048 = vmatpush1.xpose.msra.mxu0 0.0
    %1049 = vmatprep.subr.mxu0 0.0
    %1050 = vmatpush1.xpose.msra.mxu0 0.0
    %1051 = vmatprep.subr.mxu0 0.0
    %1052 = vmatpush1.xpose.msra.mxu0 0.0
    %1053 = vmatprep.subr.mxu0 0.0
    %1054 = vmatpush1.xpose.msra.mxu0 0.0
    %1055 = vmatprep.subr.mxu0 0.0
    %1056 = vmatpush1.xpose.msra.mxu0 0.0
    %1057 = vmatprep.subr.mxu0 0.0
    %1058 = vmatpush1.xpose.msra.mxu0 0.0
    %1059 = vmatprep.subr.mxu0 0.0
    %1060 = vmatpush1.xpose.msra.mxu0 0.0
    %1061 = vmatprep.subr.mxu0 0.0
    %1062 = vmatpush1.xpose.msra.mxu0 0.0
    %1063 = vmatprep.subr.mxu0 0.0
    %1064 = vmatpush1.xpose.msra.mxu0 %v1031
    %1065 = vmatprep.subr.mxu0 0.0
    %1066 = vmatpush2.xpose.msra.mxu0 0.0
    %1067 = vmatprep.subr.mxu0 0.0
    %1068 = vmatpush2.xpose.msra.mxu0 0.0
    %1069 = vmatprep.subr.mxu0 0.0
    %1070 = vmatpush2.xpose.msra.mxu0 0.0
    %1071 = vmatprep.subr.mxu0 0.0
    %1072 = vmatpush2.xpose.msra.mxu0 0.0
    %1073 = vmatprep.subr.mxu0 0.0
    %1074 = vmatpush2.xpose.msra.mxu0 0.0
    %1075 = vmatprep.subr.mxu0 0.0
    %1076 = vmatpush2.xpose.msra.mxu0 0.0
    %1077 = vmatprep.subr.mxu0 0.0
    %1078 = vmatpush2.xpose.msra.mxu0 0.0
    %1079 = vmatprep.subr.mxu0 0.0
    %1080 = vmatpush2.xpose.msra.mxu0 0.0
    %1081 = vmatprep.subr.mxu0 0.0
    %1082 = vmatpush2.xpose.msra.mxu0 0.0
    %1083 = vmatprep.subr.mxu0 0.0
    %1084 = vmatpush2.xpose.msra.mxu0 0.0
    %1085 = vmatprep.subr.mxu0 0.0
    %1086 = vmatpush2.xpose.msra.mxu0 0.0
    %1087 = vmatprep.subr.mxu0 0.0
    %1088 = vmatpush2.xpose.msra.mxu0 0.0
    %1089 = vmatprep.subr.mxu0 0.0
    %1090 = vmatpush2.xpose.msra.mxu0 0.0
    %1091 = vmatprep.subr.mxu0 0.0
    %1092 = vmatpush2.xpose.msra.mxu0 0.0
    %1093 = vmatprep.subr.mxu0 0.0
    %1094 = vmatpush2.xpose.msra.mxu0 0.0
    %1095 = vmatprep.subr.mxu0 0.0
    %1096 = vmatpush2.xpose.msra.mxu0 0.0
    %1097 = vmatprep.mubr.f32.mxu0 0.0
    %1098 = vmatmul.mubr.f32.gmra.mxu0 %v1028
    %v1099 = vpop.f32.mrf.mxu0
    %v1100 = vadd.f32 0.0, %v1099
    %v1101 = vpop.f32.mrf.mxu0
    %1102 = vdwg.mxu0
    %v1104 = vsel %vm1026, %v164, 0
    %v1107 = vsel %vm1026, %v481, 0
    %1109 = vmatprep.subr.mxu0 0.0
    %1110 = vmatpush1.xpose.msra.mxu0 0.0
    %1111 = vmatprep.subr.mxu0 0.0
    %1112 = vmatpush1.xpose.msra.mxu0 0.0
    %1113 = vmatprep.subr.mxu0 0.0
    %1114 = vmatpush1.xpose.msra.mxu0 0.0
    %1115 = vmatprep.subr.mxu0 0.0
    %1116 = vmatpush1.xpose.msra.mxu0 0.0
    %1117 = vmatprep.subr.mxu0 0.0
    %1118 = vmatpush1.xpose.msra.mxu0 0.0
    %1119 = vmatprep.subr.mxu0 0.0
    %1120 = vmatpush1.xpose.msra.mxu0 0.0
    %1121 = vmatprep.subr.mxu0 0.0
    %1122 = vmatpush1.xpose.msra.mxu0 0.0
    %1123 = vmatprep.subr.mxu0 0.0
    %1124 = vmatpush1.xpose.msra.mxu0 0.0
    %1125 = vmatprep.subr.mxu0 0.0
    %1126 = vmatpush1.xpose.msra.mxu0 0.0
    %1127 = vmatprep.subr.mxu0 0.0
    %1128 = vmatpush1.xpose.msra.mxu0 0.0
    %1129 = vmatprep.subr.mxu0 0.0
    %1130 = vmatpush1.xpose.msra.mxu0 0.0
    %1131 = vmatprep.subr.mxu0 0.0
    %1132 = vmatpush1.xpose.msra.mxu0 0.0
    %1133 = vmatprep.subr.mxu0 0.0
    %1134 = vmatpush1.xpose.msra.mxu0 0.0
    %1135 = vmatprep.subr.mxu0 0.0
    %1136 = vmatpush1.xpose.msra.mxu0 0.0
    %1137 = vmatprep.subr.mxu0 0.0
    %1138 = vmatpush1.xpose.msra.mxu0 0.0
    %1139 = vmatprep.subr.mxu0 0.0
    %1140 = vmatpush1.xpose.msra.mxu0 %v1107
    %1141 = vmatprep.subr.mxu0 0.0
    %1142 = vmatpush2.xpose.msra.mxu0 0.0
    %1143 = vmatprep.subr.mxu0 0.0
    %1144 = vmatpush2.xpose.msra.mxu0 0.0
    %1145 = vmatprep.subr.mxu0 0.0
    %1146 = vmatpush2.xpose.msra.mxu0 0.0
    %1147 = vmatprep.subr.mxu0 0.0
    %1148 = vmatpush2.xpose.msra.mxu0 0.0
    %1149 = vmatprep.subr.mxu0 0.0
    %1150 = vmatpush2.xpose.msra.mxu0 0.0
    %1151 = vmatprep.subr.mxu0 0.0
    %1152 = vmatpush2.xpose.msra.mxu0 0.0
    %1153 = vmatprep.subr.mxu0 0.0
    %1154 = vmatpush2.xpose.msra.mxu0 0.0
    %1155 = vmatprep.subr.mxu0 0.0
    %1156 = vmatpush2.xpose.msra.mxu0 0.0
    %1157 = vmatprep.subr.mxu0 0.0
    %1158 = vmatpush2.xpose.msra.mxu0 0.0
    %1159 = vmatprep.subr.mxu0 0.0
    %1160 = vmatpush2.xpose.msra.mxu0 0.0
    %1161 = vmatprep.subr.mxu0 0.0
    %1162 = vmatpush2.xpose.msra.mxu0 0.0
    %1163 = vmatprep.subr.mxu0 0.0
    %1164 = vmatpush2.xpose.msra.mxu0 0.0
    %1165 = vmatprep.subr.mxu0 0.0
    %1166 = vmatpush2.xpose.msra.mxu0 0.0
    %1167 = vmatprep.subr.mxu0 0.0
    %1168 = vmatpush2.xpose.msra.mxu0 0.0
    %1169 = vmatprep.subr.mxu0 0.0
    %1170 = vmatpush2.xpose.msra.mxu0 0.0
    %1171 = vmatprep.subr.mxu0 0.0
    %1172 = vmatpush2.xpose.msra.mxu0 0.0
    %1173 = vmatprep.mubr.f32.mxu0 0.0
    %1174 = vmatmul.mubr.f32.gmra.mxu0 %v1104
    %v1175 = vpop.f32.mrf.mxu0
    %v1176 = vadd.f32 0.0, %v1175
    %v1177 = vpop.f32.mrf.mxu0
    %1178 = vdwg.mxu0
    %v1180 = vsel %vm1026, %v234, 0
    %v1183 = vsel %vm1026, %v551, 0
    %1185 = vmatprep.subr.mxu0 0.0
    %1186 = vmatpush1.xpose.msra.mxu0 0.0
    %1187 = vmatprep.subr.mxu0 0.0
    %1188 = vmatpush1.xpose.msra.mxu0 0.0
    %1189 = vmatprep.subr.mxu0 0.0
    %1190 = vmatpush1.xpose.msra.mxu0 0.0
    %1191 = vmatprep.subr.mxu0 0.0
    %1192 = vmatpush1.xpose.msra.mxu0 0.0
    %1193 = vmatprep.subr.mxu0 0.0
    %1194 = vmatpush1.xpose.msra.mxu0 0.0
    %1195 = vmatprep.subr.mxu0 0.0
    %1196 = vmatpush1.xpose.msra.mxu0 0.0
    %1197 = vmatprep.subr.mxu0 0.0
    %1198 = vmatpush1.xpose.msra.mxu0 0.0
    %1199 = vmatprep.subr.mxu0 0.0
    %1200 = vmatpush1.xpose.msra.mxu0 0.0
    %1201 = vmatprep.subr.mxu0 0.0
    %1202 = vmatpush1.xpose.msra.mxu0 0.0
    %1203 = vmatprep.subr.mxu0 0.0
    %1204 = vmatpush1.xpose.msra.mxu0 0.0
    %1205 = vmatprep.subr.mxu0 0.0
    %1206 = vmatpush1.xpose.msra.mxu0 0.0
    %1207 = vmatprep.subr.mxu0 0.0
    %1208 = vmatpush1.xpose.msra.mxu0 0.0
    %1209 = vmatprep.subr.mxu0 0.0
    %1210 = vmatpush1.xpose.msra.mxu0 0.0
    %1211 = vmatprep.subr.mxu0 0.0
    %1212 = vmatpush1.xpose.msra.mxu0 0.0
    %1213 = vmatprep.subr.mxu0 0.0
    %1214 = vmatpush1.xpose.msra.mxu0 0.0
    %1215 = vmatprep.subr.mxu0 0.0
    %1216 = vmatpush1.xpose.msra.mxu0 %v1183
    %1217 = vmatprep.subr.mxu0 0.0
    %1218 = vmatpush2.xpose.msra.mxu0 0.0
    %1219 = vmatprep.subr.mxu0 0.0
    %1220 = vmatpush2.xpose.msra.mxu0 0.0
    %1221 = vmatprep.subr.mxu0 0.0
    %1222 = vmatpush2.xpose.msra.mxu0 0.0
    %1223 = vmatprep.subr.mxu0 0.0
    %1224 = vmatpush2.xpose.msra.mxu0 0.0
    %1225 = vmatprep.subr.mxu0 0.0
    %1226 = vmatpush2.xpose.msra.mxu0 0.0
    %1227 = vmatprep.subr.mxu0 0.0
    %1228 = vmatpush2.xpose.msra.mxu0 0.0
    %1229 = vmatprep.subr.mxu0 0.0
    %1230 = vmatpush2.xpose.msra.mxu0 0.0
    %1231 = vmatprep.subr.mxu0 0.0
    %1232 = vmatpush2.xpose.msra.mxu0 0.0
    %1233 = vmatprep.subr.mxu0 0.0
    %1234 = vmatpush2.xpose.msra.mxu0 0.0
    %1235 = vmatprep.subr.mxu0 0.0
    %1236 = vmatpush2.xpose.msra.mxu0 0.0
    %1237 = vmatprep.subr.mxu0 0.0
    %1238 = vmatpush2.xpose.msra.mxu0 0.0
    %1239 = vmatprep.subr.mxu0 0.0
    %1240 = vmatpush2.xpose.msra.mxu0 0.0
    %1241 = vmatprep.subr.mxu0 0.0
    %1242 = vmatpush2.xpose.msra.mxu0 0.0
    %1243 = vmatprep.subr.mxu0 0.0
    %1244 = vmatpush2.xpose.msra.mxu0 0.0
    %1245 = vmatprep.subr.mxu0 0.0
    %1246 = vmatpush2.xpose.msra.mxu0 0.0
    %1247 = vmatprep.subr.mxu0 0.0
    %1248 = vmatpush2.xpose.msra.mxu0 0.0
    %1249 = vmatprep.mubr.f32.mxu0 0.0
    %1250 = vmatmul.mubr.f32.gmra.mxu0 %v1180
    %v1251 = vpop.f32.mrf.mxu0
    %v1252 = vadd.f32 0.0, %v1251
    %v1253 = vpop.f32.mrf.mxu0
    %1254 = vdwg.mxu0
    %v1256 = vsel %vm1026, %v239, 0
    %v1259 = vsel %vm1026, %v556, 0
    %1261 = vmatprep.subr.mxu0 0.0
    %1262 = vmatpush1.xpose.msra.mxu0 0.0
    %1263 = vmatprep.subr.mxu0 0.0
    %1264 = vmatpush1.xpose.msra.mxu0 0.0
    %1265 = vmatprep.subr.mxu0 0.0
    %1266 = vmatpush1.xpose.msra.mxu0 0.0
    %1267 = vmatprep.subr.mxu0 0.0
    %1268 = vmatpush1.xpose.msra.mxu0 0.0
    %1269 = vmatprep.subr.mxu0 0.0
    %1270 = vmatpush1.xpose.msra.mxu0 0.0
    %1271 = vmatprep.subr.mxu0 0.0
    %1272 = vmatpush1.xpose.msra.mxu0 0.0
    %1273 = vmatprep.subr.mxu0 0.0
    %1274 = vmatpush1.xpose.msra.mxu0 0.0
    %1275 = vmatprep.subr.mxu0 0.0
    %1276 = vmatpush1.xpose.msra.mxu0 0.0
    %1277 = vmatprep.subr.mxu0 0.0
    %1278 = vmatpush1.xpose.msra.mxu0 0.0
    %1279 = vmatprep.subr.mxu0 0.0
    %1280 = vmatpush1.xpose.msra.mxu0 0.0
    %1281 = vmatprep.subr.mxu0 0.0
    %1282 = vmatpush1.xpose.msra.mxu0 0.0
    %1283 = vmatprep.subr.mxu0 0.0
    %1284 = vmatpush1.xpose.msra.mxu0 0.0
    %1285 = vmatprep.subr.mxu0 0.0
    %1286 = vmatpush1.xpose.msra.mxu0 0.0
    %1287 = vmatprep.subr.mxu0 0.0
    %1288 = vmatpush1.xpose.msra.mxu0 0.0
    %1289 = vmatprep.subr.mxu0 0.0
    %1290 = vmatpush1.xpose.msra.mxu0 0.0
    %1291 = vmatprep.subr.mxu0 0.0
    %1292 = vmatpush1.xpose.msra.mxu0 %v1259
    %1293 = vmatprep.subr.mxu0 0.0
    %1294 = vmatpush2.xpose.msra.mxu0 0.0
    %1295 = vmatprep.subr.mxu0 0.0
    %1296 = vmatpush2.xpose.msra.mxu0 0.0
    %1297 = vmatprep.subr.mxu0 0.0
    %1298 = vmatpush2.xpose.msra.mxu0 0.0
    %1299 = vmatprep.subr.mxu0 0.0
    %1300 = vmatpush2.xpose.msra.mxu0 0.0
    %1301 = vmatprep.subr.mxu0 0.0
    %1302 = vmatpush2.xpose.msra.mxu0 0.0
    %1303 = vmatprep.subr.mxu0 0.0
    %1304 = vmatpush2.xpose.msra.mxu0 0.0
    %1305 = vmatprep.subr.mxu0 0.0
    %1306 = vmatpush2.xpose.msra.mxu0 0.0
    %1307 = vmatprep.subr.mxu0 0.0
    %1308 = vmatpush2.xpose.msra.mxu0 0.0
    %1309 = vmatprep.subr.mxu0 0.0
    %1310 = vmatpush2.xpose.msra.mxu0 0.0
    %1311 = vmatprep.subr.mxu0 0.0
    %1312 = vmatpush2.xpose.msra.mxu0 0.0
    %1313 = vmatprep.subr.mxu0 0.0
    %1314 = vmatpush2.xpose.msra.mxu0 0.0
    %1315 = vmatprep.subr.mxu0 0.0
    %1316 = vmatpush2.xpose.msra.mxu0 0.0
    %1317 = vmatprep.subr.mxu0 0.0
    %1318 = vmatpush2.xpose.msra.mxu0 0.0
    %1319 = vmatprep.subr.mxu0 0.0
    %1320 = vmatpush2.xpose.msra.mxu0 0.0
    %1321 = vmatprep.subr.mxu0 0.0
    %1322 = vmatpush2.xpose.msra.mxu0 0.0
    %1323 = vmatprep.subr.mxu0 0.0
    %1324 = vmatpush2.xpose.msra.mxu0 0.0
    %1325 = vmatprep.mubr.f32.mxu0 0.0
    %1326 = vmatmul.mubr.f32.gmra.mxu0 %v1256
    %v1327 = vpop.f32.mrf.mxu0
    %v1328 = vadd.f32 0.0, %v1327
    %v1329 = vpop.f32.mrf.mxu0
    %1330 = vdwg.mxu0
    %v1332 = vsel %vm1026, %v309, 0
    %v1335 = vsel %vm1026, %v626, 0
    %1337 = vmatprep.subr.mxu0 0.0
    %1338 = vmatpush1.xpose.msra.mxu0 0.0
    %1339 = vmatprep.subr.mxu0 0.0
    %1340 = vmatpush1.xpose.msra.mxu0 0.0
    %1341 = vmatprep.subr.mxu0 0.0
    %1342 = vmatpush1.xpose.msra.mxu0 0.0
    %1343 = vmatprep.subr.mxu0 0.0
    %1344 = vmatpush1.xpose.msra.mxu0 0.0
    %1345 = vmatprep.subr.mxu0 0.0
    %1346 = vmatpush1.xpose.msra.mxu0 0.0
    %1347 = vmatprep.subr.mxu0 0.0
    %1348 = vmatpush1.xpose.msra.mxu0 0.0
    %1349 = vmatprep.subr.mxu0 0.0
    %1350 = vmatpush1.xpose.msra.mxu0 0.0
    %1351 = vmatprep.subr.mxu0 0.0
    %1352 = vmatpush1.xpose.msra.mxu0 0.0
    %1353 = vmatprep.subr.mxu0 0.0
    %1354 = vmatpush1.xpose.msra.mxu0 0.0
    %1355 = vmatprep.subr.mxu0 0.0
    %1356 = vmatpush1.xpose.msra.mxu0 0.0
    %1357 = vmatprep.subr.mxu0 0.0
    %1358 = vmatpush1.xpose.msra.mxu0 0.0
    %1359 = vmatprep.subr.mxu0 0.0
    %1360 = vmatpush1.xpose.msra.mxu0 0.0
    %1361 = vmatprep.subr.mxu0 0.0
    %1362 = vmatpush1.xpose.msra.mxu0 0.0
    %1363 = vmatprep.subr.mxu0 0.0
    %1364 = vmatpush1.xpose.msra.mxu0 0.0
    %1365 = vmatprep.subr.mxu0 0.0
    %1366 = vmatpush1.xpose.msra.mxu0 0.0
    %1367 = vmatprep.subr.mxu0 0.0
    %1368 = vmatpush1.xpose.msra.mxu0 %v1335
    %1369 = vmatprep.subr.mxu0 0.0
    %1370 = vmatpush2.xpose.msra.mxu0 0.0
    %1371 = vmatprep.subr.mxu0 0.0
    %1372 = vmatpush2.xpose.msra.mxu0 0.0
    %1373 = vmatprep.subr.mxu0 0.0
    %1374 = vmatpush2.xpose.msra.mxu0 0.0
    %1375 = vmatprep.subr.mxu0 0.0
    %1376 = vmatpush2.xpose.msra.mxu0 0.0
    %1377 = vmatprep.subr.mxu0 0.0
    %1378 = vmatpush2.xpose.msra.mxu0 0.0
    %1379 = vmatprep.subr.mxu0 0.0
    %1380 = vmatpush2.xpose.msra.mxu0 0.0
    %1381 = vmatprep.subr.mxu0 0.0
    %1382 = vmatpush2.xpose.msra.mxu0 0.0
    %1383 = vmatprep.subr.mxu0 0.0
    %1384 = vmatpush2.xpose.msra.mxu0 0.0
    %1385 = vmatprep.subr.mxu0 0.0
    %1386 = vmatpush2.xpose.msra.mxu0 0.0
    %1387 = vmatprep.subr.mxu0 0.0
    %1388 = vmatpush2.xpose.msra.mxu0 0.0
    %1389 = vmatprep.subr.mxu0 0.0
    %1390 = vmatpush2.xpose.msra.mxu0 0.0
    %1391 = vmatprep.subr.mxu0 0.0
    %1392 = vmatpush2.xpose.msra.mxu0 0.0
    %1393 = vmatprep.subr.mxu0 0.0
    %1394 = vmatpush2.xpose.msra.mxu0 0.0
    %1395 = vmatprep.subr.mxu0 0.0
    %1396 = vmatpush2.xpose.msra.mxu0 0.0
    %1397 = vmatprep.subr.mxu0 0.0
    %1398 = vmatpush2.xpose.msra.mxu0 0.0
    %1399 = vmatprep.subr.mxu0 0.0
    %1400 = vmatpush2.xpose.msra.mxu0 0.0
    %1401 = vmatprep.mubr.f32.mxu0 0.0
    %1402 = vmatmul.mubr.f32.gmra.mxu0 %v1332
    %v1403 = vpop.f32.mrf.mxu0
    %v1404 = vadd.f32 0.0, %v1403
    %v1405 = vpop.f32.mrf.mxu0
    %1406 = vdwg.mxu0
    %v1408 = vsel %vm1026, %v314, 0
    %v1411 = vsel %vm1026, %v631, 0
    %1413 = vmatprep.subr.mxu0 0.0
    %1414 = vmatpush1.xpose.msra.mxu0 0.0
    %1415 = vmatprep.subr.mxu0 0.0
    %1416 = vmatpush1.xpose.msra.mxu0 0.0
    %1417 = vmatprep.subr.mxu0 0.0
    %1418 = vmatpush1.xpose.msra.mxu0 0.0
    %1419 = vmatprep.subr.mxu0 0.0
    %1420 = vmatpush1.xpose.msra.mxu0 0.0
    %1421 = vmatprep.subr.mxu0 0.0
    %1422 = vmatpush1.xpose.msra.mxu0 0.0
    %1423 = vmatprep.subr.mxu0 0.0
    %1424 = vmatpush1.xpose.msra.mxu0 0.0
    %1425 = vmatprep.subr.mxu0 0.0
    %1426 = vmatpush1.xpose.msra.mxu0 0.0
    %1427 = vmatprep.subr.mxu0 0.0
    %1428 = vmatpush1.xpose.msra.mxu0 0.0
    %1429 = vmatprep.subr.mxu0 0.0
    %1430 = vmatpush1.xpose.msra.mxu0 0.0
    %1431 = vmatprep.subr.mxu0 0.0
    %1432 = vmatpush1.xpose.msra.mxu0 0.0
    %1433 = vmatprep.subr.mxu0 0.0
    %1434 = vmatpush1.xpose.msra.mxu0 0.0
    %1435 = vmatprep.subr.mxu0 0.0
    %1436 = vmatpush1.xpose.msra.mxu0 0.0
    %1437 = vmatprep.subr.mxu0 0.0
    %1438 = vmatpush1.xpose.msra.mxu0 0.0
    %1439 = vmatprep.subr.mxu0 0.0
    %1440 = vmatpush1.xpose.msra.mxu0 0.0
    %1441 = vmatprep.subr.mxu0 0.0
    %1442 = vmatpush1.xpose.msra.mxu0 0.0
    %1443 = vmatprep.subr.mxu0 0.0
    %1444 = vmatpush1.xpose.msra.mxu0 %v1411
    %1445 = vmatprep.subr.mxu0 0.0
    %1446 = vmatpush2.xpose.msra.mxu0 0.0
    %1447 = vmatprep.subr.mxu0 0.0
    %1448 = vmatpush2.xpose.msra.mxu0 0.0
    %1449 = vmatprep.subr.mxu0 0.0
    %1450 = vmatpush2.xpose.msra.mxu0 0.0
    %1451 = vmatprep.subr.mxu0 0.0
    %1452 = vmatpush2.xpose.msra.mxu0 0.0
    %1453 = vmatprep.subr.mxu0 0.0
    %1454 = vmatpush2.xpose.msra.mxu0 0.0
    %1455 = vmatprep.subr.mxu0 0.0
    %1456 = vmatpush2.xpose.msra.mxu0 0.0
    %1457 = vmatprep.subr.mxu0 0.0
    %1458 = vmatpush2.xpose.msra.mxu0 0.0
    %1459 = vmatprep.subr.mxu0 0.0
    %1460 = vmatpush2.xpose.msra.mxu0 0.0
    %1461 = vmatprep.subr.mxu0 0.0
    %1462 = vmatpush2.xpose.msra.mxu0 0.0
    %1463 = vmatprep.subr.mxu0 0.0
    %1464 = vmatpush2.xpose.msra.mxu0 0.0
    %1465 = vmatprep.subr.mxu0 0.0
    %1466 = vmatpush2.xpose.msra.mxu0 0.0
    %1467 = vmatprep.subr.mxu0 0.0
    %1468 = vmatpush2.xpose.msra.mxu0 0.0
    %1469 = vmatprep.subr.mxu0 0.0
    %1470 = vmatpush2.xpose.msra.mxu0 0.0
    %1471 = vmatprep.subr.mxu0 0.0
    %1472 = vmatpush2.xpose.msra.mxu0 0.0
    %1473 = vmatprep.subr.mxu0 0.0
    %1474 = vmatpush2.xpose.msra.mxu0 0.0
    %1475 = vmatprep.subr.mxu0 0.0
    %1476 = vmatpush2.xpose.msra.mxu0 0.0
    %1477 = vmatprep.mubr.f32.mxu0 0.0
    %1478 = vmatmul.mubr.f32.gmra.mxu0 %v1408
    %v1479 = vpop.f32.mrf.mxu0
    %v1480 = vadd.f32 0.0, %v1479
    %v1481 = vpop.f32.mrf.mxu0
    %1482 = vdwg.mxu0
    %v1484 = vsel %vm1026, %v384, 0
    %v1487 = vsel %vm1026, %v701, 0
    %1489 = vmatprep.subr.mxu0 0.0
    %1490 = vmatpush1.xpose.msra.mxu0 0.0
    %1491 = vmatprep.subr.mxu0 0.0
    %1492 = vmatpush1.xpose.msra.mxu0 0.0
    %1493 = vmatprep.subr.mxu0 0.0
    %1494 = vmatpush1.xpose.msra.mxu0 0.0
    %1495 = vmatprep.subr.mxu0 0.0
    %1496 = vmatpush1.xpose.msra.mxu0 0.0
    %1497 = vmatprep.subr.mxu0 0.0
    %1498 = vmatpush1.xpose.msra.mxu0 0.0
    %1499 = vmatprep.subr.mxu0 0.0
    %1500 = vmatpush1.xpose.msra.mxu0 0.0
    %1501 = vmatprep.subr.mxu0 0.0
    %1502 = vmatpush1.xpose.msra.mxu0 0.0
    %1503 = vmatprep.subr.mxu0 0.0
    %1504 = vmatpush1.xpose.msra.mxu0 0.0
    %1505 = vmatprep.subr.mxu0 0.0
    %1506 = vmatpush1.xpose.msra.mxu0 0.0
    %1507 = vmatprep.subr.mxu0 0.0
    %1508 = vmatpush1.xpose.msra.mxu0 0.0
    %1509 = vmatprep.subr.mxu0 0.0
    %1510 = vmatpush1.xpose.msra.mxu0 0.0
    %1511 = vmatprep.subr.mxu0 0.0
    %1512 = vmatpush1.xpose.msra.mxu0 0.0
    %1513 = vmatprep.subr.mxu0 0.0
    %1514 = vmatpush1.xpose.msra.mxu0 0.0
    %1515 = vmatprep.subr.mxu0 0.0
    %1516 = vmatpush1.xpose.msra.mxu0 0.0
    %1517 = vmatprep.subr.mxu0 0.0
    %1518 = vmatpush1.xpose.msra.mxu0 0.0
    %1519 = vmatprep.subr.mxu0 0.0
    %1520 = vmatpush1.xpose.msra.mxu0 %v1487
    %1521 = vmatprep.subr.mxu0 0.0
    %1522 = vmatpush2.xpose.msra.mxu0 0.0
    %1523 = vmatprep.subr.mxu0 0.0
    %1524 = vmatpush2.xpose.msra.mxu0 0.0
    %1525 = vmatprep.subr.mxu0 0.0
    %1526 = vmatpush2.xpose.msra.mxu0 0.0
    %1527 = vmatprep.subr.mxu0 0.0
    %1528 = vmatpush2.xpose.msra.mxu0 0.0
    %1529 = vmatprep.subr.mxu0 0.0
    %1530 = vmatpush2.xpose.msra.mxu0 0.0
    %1531 = vmatprep.subr.mxu0 0.0
    %1532 = vmatpush2.xpose.msra.mxu0 0.0
    %1533 = vmatprep.subr.mxu0 0.0
    %1534 = vmatpush2.xpose.msra.mxu0 0.0
    %1535 = vmatprep.subr.mxu0 0.0
    %1536 = vmatpush2.xpose.msra.mxu0 0.0
    %1537 = vmatprep.subr.mxu0 0.0
    %1538 = vmatpush2.xpose.msra.mxu0 0.0
    %1539 = vmatprep.subr.mxu0 0.0
    %1540 = vmatpush2.xpose.msra.mxu0 0.0
    %1541 = vmatprep.subr.mxu0 0.0
    %1542 = vmatpush2.xpose.msra.mxu0 0.0
    %1543 = vmatprep.subr.mxu0 0.0
    %1544 = vmatpush2.xpose.msra.mxu0 0.0
    %1545 = vmatprep.subr.mxu0 0.0
    %1546 = vmatpush2.xpose.msra.mxu0 0.0
    %1547 = vmatprep.subr.mxu0 0.0
    %1548 = vmatpush2.xpose.msra.mxu0 0.0
    %1549 = vmatprep.subr.mxu0 0.0
    %1550 = vmatpush2.xpose.msra.mxu0 0.0
    %1551 = vmatprep.subr.mxu0 0.0
    %1552 = vmatpush2.xpose.msra.mxu0 0.0
    %1553 = vmatprep.mubr.f32.mxu0 0.0
    %1554 = vmatmul.mubr.f32.gmra.mxu0 %v1484
    %v1555 = vpop.f32.mrf.mxu0
    %v1556 = vadd.f32 0.0, %v1555
    %v1557 = vpop.f32.mrf.mxu0
    %1558 = vdwg.mxu0
    %v1560 = vsel %vm1026, %v389, 0
    %v1563 = vsel %vm1026, %v706, 0
    %1565 = vmatprep.subr.mxu0 0.0
    %1566 = vmatpush1.xpose.msra.mxu0 0.0
    %1567 = vmatprep.subr.mxu0 0.0
    %1568 = vmatpush1.xpose.msra.mxu0 0.0
    %1569 = vmatprep.subr.mxu0 0.0
    %1570 = vmatpush1.xpose.msra.mxu0 0.0
    %1571 = vmatprep.subr.mxu0 0.0
    %1572 = vmatpush1.xpose.msra.mxu0 0.0
    %1573 = vmatprep.subr.mxu0 0.0
    %1574 = vmatpush1.xpose.msra.mxu0 0.0
    %1575 = vmatprep.subr.mxu0 0.0
    %1576 = vmatpush1.xpose.msra.mxu0 0.0
    %1577 = vmatprep.subr.mxu0 0.0
    %1578 = vmatpush1.xpose.msra.mxu0 0.0
    %1579 = vmatprep.subr.mxu0 0.0
    %1580 = vmatpush1.xpose.msra.mxu0 0.0
    %1581 = vmatprep.subr.mxu0 0.0
    %1582 = vmatpush1.xpose.msra.mxu0 0.0
    %1583 = vmatprep.subr.mxu0 0.0
    %1584 = vmatpush1.xpose.msra.mxu0 0.0
    %1585 = vmatprep.subr.mxu0 0.0
    %1586 = vmatpush1.xpose.msra.mxu0 0.0
    %1587 = vmatprep.subr.mxu0 0.0
    %1588 = vmatpush1.xpose.msra.mxu0 0.0
    %1589 = vmatprep.subr.mxu0 0.0
    %1590 = vmatpush1.xpose.msra.mxu0 0.0
    %1591 = vmatprep.subr.mxu0 0.0
    %1592 = vmatpush1.xpose.msra.mxu0 0.0
    %1593 = vmatprep.subr.mxu0 0.0
    %1594 = vmatpush1.xpose.msra.mxu0 0.0
    %1595 = vmatprep.subr.mxu0 0.0
    %1596 = vmatpush1.xpose.msra.mxu0 %v1563
    %1597 = vmatprep.subr.mxu0 0.0
    %1598 = vmatpush2.xpose.msra.mxu0 0.0
    %1599 = vmatprep.subr.mxu0 0.0
    %1600 = vmatpush2.xpose.msra.mxu0 0.0
    %1601 = vmatprep.subr.mxu0 0.0
    %1602 = vmatpush2.xpose.msra.mxu0 0.0
    %1603 = vmatprep.subr.mxu0 0.0
    %1604 = vmatpush2.xpose.msra.mxu0 0.0
    %1605 = vmatprep.subr.mxu0 0.0
    %1606 = vmatpush2.xpose.msra.mxu0 0.0
    %1607 = vmatprep.subr.mxu0 0.0
    %1608 = vmatpush2.xpose.msra.mxu0 0.0
    %1609 = vmatprep.subr.mxu0 0.0
    %1610 = vmatpush2.xpose.msra.mxu0 0.0
    %1611 = vmatprep.subr.mxu0 0.0
    %1612 = vmatpush2.xpose.msra.mxu0 0.0
    %1613 = vmatprep.subr.mxu0 0.0
    %1614 = vmatpush2.xpose.msra.mxu0 0.0
    %1615 = vmatprep.subr.mxu0 0.0
    %1616 = vmatpush2.xpose.msra.mxu0 0.0
    %1617 = vmatprep.subr.mxu0 0.0
    %1618 = vmatpush2.xpose.msra.mxu0 0.0
    %1619 = vmatprep.subr.mxu0 0.0
    %1620 = vmatpush2.xpose.msra.mxu0 0.0
    %1621 = vmatprep.subr.mxu0 0.0
    %1622 = vmatpush2.xpose.msra.mxu0 0.0
    %1623 = vmatprep.subr.mxu0 0.0
    %1624 = vmatpush2.xpose.msra.mxu0 0.0
    %1625 = vmatprep.subr.mxu0 0.0
    %1626 = vmatpush2.xpose.msra.mxu0 0.0
    %1627 = vmatprep.subr.mxu0 0.0
    %1628 = vmatpush2.xpose.msra.mxu0 0.0
    %1629 = vmatprep.mubr.f32.mxu0 0.0
    %1630 = vmatmul.mubr.f32.gmra.mxu0 %v1560
    %v1631 = vpop.f32.mrf.mxu0
    %v1632 = vadd.f32 0.0, %v1631
    %v1633 = vpop.f32.mrf.mxu0
    %1634 = vdwg.mxu0
    %v1635 = vsel %vm1026, %v1100, -inf
    %1636 = vmax.xlane.f32.xlu0 %v1635
    %v1637 = vpop.xlane.xlu0 %1636
    %v1638 = vsel %vm1026, %v1176, -inf
    %1639 = vmax.xlane.f32.xlu0 %v1638
    %v1640 = vpop.xlane.xlu0 %1639
    %v1641 = vsel %vm1026, %v1252, -inf
    %1642 = vmax.xlane.f32.xlu0 %v1641
    %v1643 = vpop.xlane.xlu0 %1642
    %v1644 = vsel %vm1026, %v1328, -inf
    %1645 = vmax.xlane.f32.xlu0 %v1644
    %v1646 = vpop.xlane.xlu0 %1645
    %v1647 = vsel %vm1026, %v1404, -inf
    %1648 = vmax.xlane.f32.xlu0 %v1647
    %v1649 = vpop.xlane.xlu0 %1648
    %v1650 = vsel %vm1026, %v1480, -inf
    %1651 = vmax.xlane.f32.xlu0 %v1650
    %v1652 = vpop.xlane.xlu0 %1651
    %v1653 = vsel %vm1026, %v1556, -inf
    %1654 = vmax.xlane.f32.xlu0 %v1653
    %v1655 = vpop.xlane.xlu0 %1654
    %v1656 = vsel %vm1026, %v1632, -inf
    %1657 = vmax.xlane.f32.xlu0 %v1656
    %v1658 = vpop.xlane.xlu0 %1657
    %v1659 = vsub.f32 %v1100, %v1637
    %v1660 = vsub.f32 %v1176, %v1640
    %v1661 = vsub.f32 %v1252, %v1643
    %v1662 = vsub.f32 %v1328, %v1646
    %v1663 = vsub.f32 %v1404, %v1649
    %v1664 = vsub.f32 %v1480, %v1652
    %v1665 = vsub.f32 %v1556, %v1655
    %v1666 = vsub.f32 %v1632, %v1658
    %v1667 = vmul.f32 %v1659, 1.442695
    %v1668 = vpow.pop %v1667
    %v1669 = vmul.f32 %v1660, 1.442695
    %v1670 = vpow.pop %v1669
    %v1671 = vmul.f32 %v1661, 1.442695
    %v1672 = vpow.pop %v1671
    %v1673 = vmul.f32 %v1662, 1.442695
    %v1674 = vpow.pop %v1673
    %v1675 = vmul.f32 %v1663, 1.442695
    %v1676 = vpow.pop %v1675
    %v1677 = vmul.f32 %v1664, 1.442695
    %v1678 = vpow.pop %v1677
    %v1679 = vmul.f32 %v1665, 1.442695
    %v1680 = vpow.pop %v1679
    %v1681 = vmul.f32 %v1666, 1.442695
    %v1682 = vpow.pop %v1681
    %v1683 = vsel %vm1026, %v1668, 0.0
    %1684 = vadd.xlane.f32.xlu0 %v1683
    %v1685 = vpop.xlane.xlu0 %1684
    %v1686 = vsel %vm1026, %v1670, 0.0
    %1687 = vadd.xlane.f32.xlu0 %v1686
    %v1688 = vpop.xlane.xlu0 %1687
    %v1689 = vsel %vm1026, %v1672, 0.0
    %1690 = vadd.xlane.f32.xlu0 %v1689
    %v1691 = vpop.xlane.xlu0 %1690
    %v1692 = vsel %vm1026, %v1674, 0.0
    %1693 = vadd.xlane.f32.xlu0 %v1692
    %v1694 = vpop.xlane.xlu0 %1693
    %v1695 = vsel %vm1026, %v1676, 0.0
    %1696 = vadd.xlane.f32.xlu0 %v1695
    %v1697 = vpop.xlane.xlu0 %1696
    %v1698 = vsel %vm1026, %v1678, 0.0
    %1699 = vadd.xlane.f32.xlu0 %v1698
    %v1700 = vpop.xlane.xlu0 %1699
    %v1701 = vsel %vm1026, %v1680, 0.0
    %1702 = vadd.xlane.f32.xlu0 %v1701
    %v1703 = vpop.xlane.xlu0 %1702
    %v1704 = vsel %vm1026, %v1682, 0.0
    %1705 = vadd.xlane.f32.xlu0 %v1704
    %v1706 = vpop.xlane.xlu0 %1705
    %v1707 = vrcp.pop %v1685
    %v1708 = vrcp.pop %v1688
    %v1709 = vrcp.pop %v1691
    %v1710 = vrcp.pop %v1694
    %v1711 = vrcp.pop %v1697
    %v1712 = vrcp.pop %v1700
    %v1713 = vrcp.pop %v1703
    %v1714 = vrcp.pop %v1706
    %v1715 = vmul.f32 %v1668, %v1707
    %v1716 = vmul.f32 %v1670, %v1708
    %v1717 = vmul.f32 %v1672, %v1709
    %v1718 = vmul.f32 %v1674, %v1710
    %v1719 = vmul.f32 %v1676, %v1711
    %v1720 = vmul.f32 %v1678, %v1712
    %v1721 = vmul.f32 %v1680, %v1713
    %v1722 = vmul.f32 %v1682, %v1714
    %v1724 = vsel %vm1026, %v1715, 0
    %1726 = vmatprep.subr.mxu0 0.0
    %1727 = vmatpush1.msra.mxu0 0.0
    %1728 = vmatprep.subr.mxu0 0.0
    %1729 = vmatpush1.msra.mxu0 0.0
    %1730 = vmatprep.subr.mxu0 0.0
    %1731 = vmatpush1.msra.mxu0 0.0
    %1732 = vmatprep.subr.mxu0 0.0
    %1733 = vmatpush1.msra.mxu0 0.0
    %1734 = vmatprep.subr.mxu0 0.0
    %1735 = vmatpush1.msra.mxu0 0.0
    %1736 = vmatprep.subr.mxu0 0.0
    %1737 = vmatpush1.msra.mxu0 0.0
    %1738 = vmatprep.subr.mxu0 0.0
    %1739 = vmatpush1.msra.mxu0 0.0
    %1740 = vmatprep.subr.mxu0 0.0
    %1741 = vmatpush1.msra.mxu0 0.0
    %1742 = vmatprep.subr.mxu0 0.0
    %1743 = vmatpush1.msra.mxu0 0.0
    %1744 = vmatprep.subr.mxu0 0.0
    %1745 = vmatpush1.msra.mxu0 0.0
    %1746 = vmatprep.subr.mxu0 0.0
    %1747 = vmatpush1.msra.mxu0 0.0
    %1748 = vmatprep.subr.mxu0 0.0
    %1749 = vmatpush1.msra.mxu0 0.0
    %1750 = vmatprep.subr.mxu0 0.0
    %1751 = vmatpush1.msra.mxu0 0.0
    %1752 = vmatprep.subr.mxu0 0.0
    %1753 = vmatpush1.msra.mxu0 0.0
    %1754 = vmatprep.subr.mxu0 0.0
    %1755 = vmatpush1.msra.mxu0 0.0
    %1756 = vmatprep.subr.mxu0 0.0
    %1757 = vmatpush1.msra.mxu0 %v793
    %1758 = vmatprep.subr.mxu0 0.0
    %1759 = vmatpush2.msra.mxu0 0.0
    %1760 = vmatprep.subr.mxu0 0.0
    %1761 = vmatpush2.msra.mxu0 0.0
    %1762 = vmatprep.subr.mxu0 0.0
    %1763 = vmatpush2.msra.mxu0 0.0
    %1764 = vmatprep.subr.mxu0 0.0
    %1765 = vmatpush2.msra.mxu0 0.0
    %1766 = vmatprep.subr.mxu0 0.0
    %1767 = vmatpush2.msra.mxu0 0.0
    %1768 = vmatprep.subr.mxu0 0.0
    %1769 = vmatpush2.msra.mxu0 0.0
    %1770 = vmatprep.subr.mxu0 0.0
    %1771 = vmatpush2.msra.mxu0 0.0
    %1772 = vmatprep.subr.mxu0 0.0
    %1773 = vmatpush2.msra.mxu0 0.0
    %1774 = vmatprep.subr.mxu0 0.0
    %1775 = vmatpush2.msra.mxu0 0.0
    %1776 = vmatprep.subr.mxu0 0.0
    %1777 = vmatpush2.msra.mxu0 0.0
    %1778 = vmatprep.subr.mxu0 0.0
    %1779 = vmatpush2.msra.mxu0 0.0
    %1780 = vmatprep.subr.mxu0 0.0
    %1781 = vmatpush2.msra.mxu0 0.0
    %1782 = vmatprep.subr.mxu0 0.0
    %1783 = vmatpush2.msra.mxu0 0.0
    %1784 = vmatprep.subr.mxu0 0.0
    %1785 = vmatpush2.msra.mxu0 0.0
    %1786 = vmatprep.subr.mxu0 0.0
    %1787 = vmatpush2.msra.mxu0 0.0
    %1788 = vmatprep.subr.mxu0 0.0
    %1789 = vmatpush2.msra.mxu0 0.0
    %1790 = vmatprep.mubr.f32.mxu0 0.0
    %1791 = vmatmul.mubr.f32.gmra.mxu0 %v1724
    %v1792 = vpop.f32.mrf.mxu0
    %v1793 = vadd.f32 0.0, %v1792
    %v1794 = vpop.f32.mrf.mxu0
    %1795 = vdwg.mxu0
    %v1797 = vsel %vm1026, %v1716, 0
    %1799 = vmatprep.subr.mxu0 0.0
    %1800 = vmatpush1.msra.mxu0 0.0
    %1801 = vmatprep.subr.mxu0 0.0
    %1802 = vmatpush1.msra.mxu0 0.0
    %1803 = vmatprep.subr.mxu0 0.0
    %1804 = vmatpush1.msra.mxu0 0.0
    %1805 = vmatprep.subr.mxu0 0.0
    %1806 = vmatpush1.msra.mxu0 0.0
    %1807 = vmatprep.subr.mxu0 0.0
    %1808 = vmatpush1.msra.mxu0 0.0
    %1809 = vmatprep.subr.mxu0 0.0
    %1810 = vmatpush1.msra.mxu0 0.0
    %1811 = vmatprep.subr.mxu0 0.0
    %1812 = vmatpush1.msra.mxu0 0.0
    %1813 = vmatprep.subr.mxu0 0.0
    %1814 = vmatpush1.msra.mxu0 0.0
    %1815 = vmatprep.subr.mxu0 0.0
    %1816 = vmatpush1.msra.mxu0 0.0
    %1817 = vmatprep.subr.mxu0 0.0
    %1818 = vmatpush1.msra.mxu0 0.0
    %1819 = vmatprep.subr.mxu0 0.0
    %1820 = vmatpush1.msra.mxu0 0.0
    %1821 = vmatprep.subr.mxu0 0.0
    %1822 = vmatpush1.msra.mxu0 0.0
    %1823 = vmatprep.subr.mxu0 0.0
    %1824 = vmatpush1.msra.mxu0 0.0
    %1825 = vmatprep.subr.mxu0 0.0
    %1826 = vmatpush1.msra.mxu0 0.0
    %1827 = vmatprep.subr.mxu0 0.0
    %1828 = vmatpush1.msra.mxu0 0.0
    %1829 = vmatprep.subr.mxu0 0.0
    %1830 = vmatpush1.msra.mxu0 %v798
    %1831 = vmatprep.subr.mxu0 0.0
    %1832 = vmatpush2.msra.mxu0 0.0
    %1833 = vmatprep.subr.mxu0 0.0
    %1834 = vmatpush2.msra.mxu0 0.0
    %1835 = vmatprep.subr.mxu0 0.0
    %1836 = vmatpush2.msra.mxu0 0.0
    %1837 = vmatprep.subr.mxu0 0.0
    %1838 = vmatpush2.msra.mxu0 0.0
    %1839 = vmatprep.subr.mxu0 0.0
    %1840 = vmatpush2.msra.mxu0 0.0
    %1841 = vmatprep.subr.mxu0 0.0
    %1842 = vmatpush2.msra.mxu0 0.0
    %1843 = vmatprep.subr.mxu0 0.0
    %1844 = vmatpush2.msra.mxu0 0.0
    %1845 = vmatprep.subr.mxu0 0.0
    %1846 = vmatpush2.msra.mxu0 0.0
    %1847 = vmatprep.subr.mxu0 0.0
    %1848 = vmatpush2.msra.mxu0 0.0
    %1849 = vmatprep.subr.mxu0 0.0
    %1850 = vmatpush2.msra.mxu0 0.0
    %1851 = vmatprep.subr.mxu0 0.0
    %1852 = vmatpush2.msra.mxu0 0.0
    %1853 = vmatprep.subr.mxu0 0.0
    %1854 = vmatpush2.msra.mxu0 0.0
    %1855 = vmatprep.subr.mxu0 0.0
    %1856 = vmatpush2.msra.mxu0 0.0
    %1857 = vmatprep.subr.mxu0 0.0
    %1858 = vmatpush2.msra.mxu0 0.0
    %1859 = vmatprep.subr.mxu0 0.0
    %1860 = vmatpush2.msra.mxu0 0.0
    %1861 = vmatprep.subr.mxu0 0.0
    %1862 = vmatpush2.msra.mxu0 0.0
    %1863 = vmatprep.mubr.f32.mxu0 0.0
    %1864 = vmatmul.mubr.f32.gmra.mxu0 %v1797
    %v1865 = vpop.f32.mrf.mxu0
    %v1866 = vadd.f32 0.0, %v1865
    %v1867 = vpop.f32.mrf.mxu0
    %1868 = vdwg.mxu0
    %v1870 = vsel %vm1026, %v1717, 0
    %1872 = vmatprep.subr.mxu0 0.0
    %1873 = vmatpush1.msra.mxu0 0.0
    %1874 = vmatprep.subr.mxu0 0.0
    %1875 = vmatpush1.msra.mxu0 0.0
    %1876 = vmatprep.subr.mxu0 0.0
    %1877 = vmatpush1.msra.mxu0 0.0
    %1878 = vmatprep.subr.mxu0 0.0
    %1879 = vmatpush1.msra.mxu0 0.0
    %1880 = vmatprep.subr.mxu0 0.0
    %1881 = vmatpush1.msra.mxu0 0.0
    %1882 = vmatprep.subr.mxu0 0.0
    %1883 = vmatpush1.msra.mxu0 0.0
    %1884 = vmatprep.subr.mxu0 0.0
    %1885 = vmatpush1.msra.mxu0 0.0
    %1886 = vmatprep.subr.mxu0 0.0
    %1887 = vmatpush1.msra.mxu0 0.0
    %1888 = vmatprep.subr.mxu0 0.0
    %1889 = vmatpush1.msra.mxu0 0.0
    %1890 = vmatprep.subr.mxu0 0.0
    %1891 = vmatpush1.msra.mxu0 0.0
    %1892 = vmatprep.subr.mxu0 0.0
    %1893 = vmatpush1.msra.mxu0 0.0
    %1894 = vmatprep.subr.mxu0 0.0
    %1895 = vmatpush1.msra.mxu0 0.0
    %1896 = vmatprep.subr.mxu0 0.0
    %1897 = vmatpush1.msra.mxu0 0.0
    %1898 = vmatprep.subr.mxu0 0.0
    %1899 = vmatpush1.msra.mxu0 0.0
    %1900 = vmatprep.subr.mxu0 0.0
    %1901 = vmatpush1.msra.mxu0 0.0
    %1902 = vmatprep.subr.mxu0 0.0
    %1903 = vmatpush1.msra.mxu0 %v868
    %1904 = vmatprep.subr.mxu0 0.0
    %1905 = vmatpush2.msra.mxu0 0.0
    %1906 = vmatprep.subr.mxu0 0.0
    %1907 = vmatpush2.msra.mxu0 0.0
    %1908 = vmatprep.subr.mxu0 0.0
    %1909 = vmatpush2.msra.mxu0 0.0
    %1910 = vmatprep.subr.mxu0 0.0
    %1911 = vmatpush2.msra.mxu0 0.0
    %1912 = vmatprep.subr.mxu0 0.0
    %1913 = vmatpush2.msra.mxu0 0.0
    %1914 = vmatprep.subr.mxu0 0.0
    %1915 = vmatpush2.msra.mxu0 0.0
    %1916 = vmatprep.subr.mxu0 0.0
    %1917 = vmatpush2.msra.mxu0 0.0
    %1918 = vmatprep.subr.mxu0 0.0
    %1919 = vmatpush2.msra.mxu0 0.0
    %1920 = vmatprep.subr.mxu0 0.0
    %1921 = vmatpush2.msra.mxu0 0.0
    %1922 = vmatprep.subr.mxu0 0.0
    %1923 = vmatpush2.msra.mxu0 0.0
    %1924 = vmatprep.subr.mxu0 0.0
    %1925 = vmatpush2.msra.mxu0 0.0
    %1926 = vmatprep.subr.mxu0 0.0
    %1927 = vmatpush2.msra.mxu0 0.0
    %1928 = vmatprep.subr.mxu0 0.0
    %1929 = vmatpush2.msra.mxu0 0.0
    %1930 = vmatprep.subr.mxu0 0.0
    %1931 = vmatpush2.msra.mxu0 0.0
    %1932 = vmatprep.subr.mxu0 0.0
    %1933 = vmatpush2.msra.mxu0 0.0
    %1934 = vmatprep.subr.mxu0 0.0
    %1935 = vmatpush2.msra.mxu0 0.0
    %1936 = vmatprep.mubr.f32.mxu0 0.0
    %1937 = vmatmul.mubr.f32.gmra.mxu0 %v1870
    %v1938 = vpop.f32.mrf.mxu0
    %v1939 = vadd.f32 0.0, %v1938
    %v1940 = vpop.f32.mrf.mxu0
    %1941 = vdwg.mxu0
    %v1943 = vsel %vm1026, %v1718, 0
    %1945 = vmatprep.subr.mxu0 0.0
    %1946 = vmatpush1.msra.mxu0 0.0
    %1947 = vmatprep.subr.mxu0 0.0
    %1948 = vmatpush1.msra.mxu0 0.0
    %1949 = vmatprep.subr.mxu0 0.0
    %1950 = vmatpush1.msra.mxu0 0.0
    %1951 = vmatprep.subr.mxu0 0.0
    %1952 = vmatpush1.msra.mxu0 0.0
    %1953 = vmatprep.subr.mxu0 0.0
    %1954 = vmatpush1.msra.mxu0 0.0
    %1955 = vmatprep.subr.mxu0 0.0
    %1956 = vmatpush1.msra.mxu0 0.0
    %1957 = vmatprep.subr.mxu0 0.0
    %1958 = vmatpush1.msra.mxu0 0.0
    %1959 = vmatprep.subr.mxu0 0.0
    %1960 = vmatpush1.msra.mxu0 0.0
    %1961 = vmatprep.subr.mxu0 0.0
    %1962 = vmatpush1.msra.mxu0 0.0
    %1963 = vmatprep.subr.mxu0 0.0
    %1964 = vmatpush1.msra.mxu0 0.0
    %1965 = vmatprep.subr.mxu0 0.0
    %1966 = vmatpush1.msra.mxu0 0.0
    %1967 = vmatprep.subr.mxu0 0.0
    %1968 = vmatpush1.msra.mxu0 0.0
    %1969 = vmatprep.subr.mxu0 0.0
    %1970 = vmatpush1.msra.mxu0 0.0
    %1971 = vmatprep.subr.mxu0 0.0
    %1972 = vmatpush1.msra.mxu0 0.0
    %1973 = vmatprep.subr.mxu0 0.0
    %1974 = vmatpush1.msra.mxu0 0.0
    %1975 = vmatprep.subr.mxu0 0.0
    %1976 = vmatpush1.msra.mxu0 %v873
    %1977 = vmatprep.subr.mxu0 0.0
    %1978 = vmatpush2.msra.mxu0 0.0
    %1979 = vmatprep.subr.mxu0 0.0
    %1980 = vmatpush2.msra.mxu0 0.0
    %1981 = vmatprep.subr.mxu0 0.0
    %1982 = vmatpush2.msra.mxu0 0.0
    %1983 = vmatprep.subr.mxu0 0.0
    %1984 = vmatpush2.msra.mxu0 0.0
    %1985 = vmatprep.subr.mxu0 0.0
    %1986 = vmatpush2.msra.mxu0 0.0
    %1987 = vmatprep.subr.mxu0 0.0
    %1988 = vmatpush2.msra.mxu0 0.0
    %1989 = vmatprep.subr.mxu0 0.0
    %1990 = vmatpush2.msra.mxu0 0.0
    %1991 = vmatprep.subr.mxu0 0.0
    %1992 = vmatpush2.msra.mxu0 0.0
    %1993 = vmatprep.subr.mxu0 0.0
    %1994 = vmatpush2.msra.mxu0 0.0
    %1995 = vmatprep.subr.mxu0 0.0
    %1996 = vmatpush2.msra.mxu0 0.0
    %1997 = vmatprep.subr.mxu0 0.0
    %1998 = vmatpush2.msra.mxu0 0.0
    %1999 = vmatprep.subr.mxu0 0.0
    %2000 = vmatpush2.msra.mxu0 0.0
    %2001 = vmatprep.subr.mxu0 0.0
    %2002 = vmatpush2.msra.mxu0 0.0
    %2003 = vmatprep.subr.mxu0 0.0
    %2004 = vmatpush2.msra.mxu0 0.0
    %2005 = vmatprep.subr.mxu0 0.0
    %2006 = vmatpush2.msra.mxu0 0.0
    %2007 = vmatprep.subr.mxu0 0.0
    %2008 = vmatpush2.msra.mxu0 0.0
    %2009 = vmatprep.mubr.f32.mxu0 0.0
    %2010 = vmatmul.mubr.f32.gmra.mxu0 %v1943
    %v2011 = vpop.f32.mrf.mxu0
    %v2012 = vadd.f32 0.0, %v2011
    %v2013 = vpop.f32.mrf.mxu0
    %2014 = vdwg.mxu0
    %v2016 = vsel %vm1026, %v1719, 0
    %2018 = vmatprep.subr.mxu0 0.0
    %2019 = vmatpush1.msra.mxu0 0.0
    %2020 = vmatprep.subr.mxu0 0.0
    %2021 = vmatpush1.msra.mxu0 0.0
    %2022 = vmatprep.subr.mxu0 0.0
    %2023 = vmatpush1.msra.mxu0 0.0
    %2024 = vmatprep.subr.mxu0 0.0
    %2025 = vmatpush1.msra.mxu0 0.0
    %2026 = vmatprep.subr.mxu0 0.0
    %2027 = vmatpush1.msra.mxu0 0.0
    %2028 = vmatprep.subr.mxu0 0.0
    %2029 = vmatpush1.msra.mxu0 0.0
    %2030 = vmatprep.subr.mxu0 0.0
    %2031 = vmatpush1.msra.mxu0 0.0
    %2032 = vmatprep.subr.mxu0 0.0
    %2033 = vmatpush1.msra.mxu0 0.0
    %2034 = vmatprep.subr.mxu0 0.0
    %2035 = vmatpush1.msra.mxu0 0.0
    %2036 = vmatprep.subr.mxu0 0.0
    %2037 = vmatpush1.msra.mxu0 0.0
    %2038 = vmatprep.subr.mxu0 0.0
    %2039 = vmatpush1.msra.mxu0 0.0
    %2040 = vmatprep.subr.mxu0 0.0
    %2041 = vmatpush1.msra.mxu0 0.0
    %2042 = vmatprep.subr.mxu0 0.0
    %2043 = vmatpush1.msra.mxu0 0.0
    %2044 = vmatprep.subr.mxu0 0.0
    %2045 = vmatpush1.msra.mxu0 0.0
    %2046 = vmatprep.subr.mxu0 0.0
    %2047 = vmatpush1.msra.mxu0 0.0
    %2048 = vmatprep.subr.mxu0 0.0
    %2049 = vmatpush1.msra.mxu0 %v943
    %2050 = vmatprep.subr.mxu0 0.0
    %2051 = vmatpush2.msra.mxu0 0.0
    %2052 = vmatprep.subr.mxu0 0.0
    %2053 = vmatpush2.msra.mxu0 0.0
    %2054 = vmatprep.subr.mxu0 0.0
    %2055 = vmatpush2.msra.mxu0 0.0
    %2056 = vmatprep.subr.mxu0 0.0
    %2057 = vmatpush2.msra.mxu0 0.0
    %2058 = vmatprep.subr.mxu0 0.0
    %2059 = vmatpush2.msra.mxu0 0.0
    %2060 = vmatprep.subr.mxu0 0.0
    %2061 = vmatpush2.msra.mxu0 0.0
    %2062 = vmatprep.subr.mxu0 0.0
    %2063 = vmatpush2.msra.mxu0 0.0
    %2064 = vmatprep.subr.mxu0 0.0
    %2065 = vmatpush2.msra.mxu0 0.0
    %2066 = vmatprep.subr.mxu0 0.0
    %2067 = vmatpush2.msra.mxu0 0.0
    %2068 = vmatprep.subr.mxu0 0.0
    %2069 = vmatpush2.msra.mxu0 0.0
    %2070 = vmatprep.subr.mxu0 0.0
    %2071 = vmatpush2.msra.mxu0 0.0
    %2072 = vmatprep.subr.mxu0 0.0
    %2073 = vmatpush2.msra.mxu0 0.0
    %2074 = vmatprep.subr.mxu0 0.0
    %2075 = vmatpush2.msra.mxu0 0.0
    %2076 = vmatprep.subr.mxu0 0.0
    %2077 = vmatpush2.msra.mxu0 0.0
    %2078 = vmatprep.subr.mxu0 0.0
    %2079 = vmatpush2.msra.mxu0 0.0
    %2080 = vmatprep.subr.mxu0 0.0
    %2081 = vmatpush2.msra.mxu0 0.0
    %2082 = vmatprep.mubr.f32.mxu0 0.0
    %2083 = vmatmul.mubr.f32.gmra.mxu0 %v2016
    %v2084 = vpop.f32.mrf.mxu0
    %v2085 = vadd.f32 0.0, %v2084
    %v2086 = vpop.f32.mrf.mxu0
    %2087 = vdwg.mxu0
    %v2089 = vsel %vm1026, %v1720, 0
    %2091 = vmatprep.subr.mxu0 0.0
    %2092 = vmatpush1.msra.mxu0 0.0
    %2093 = vmatprep.subr.mxu0 0.0
    %2094 = vmatpush1.msra.mxu0 0.0
    %2095 = vmatprep.subr.mxu0 0.0
    %2096 = vmatpush1.msra.mxu0 0.0
    %2097 = vmatprep.subr.mxu0 0.0
    %2098 = vmatpush1.msra.mxu0 0.0
    %2099 = vmatprep.subr.mxu0 0.0
    %2100 = vmatpush1.msra.mxu0 0.0
    %2101 = vmatprep.subr.mxu0 0.0
    %2102 = vmatpush1.msra.mxu0 0.0
    %2103 = vmatprep.subr.mxu0 0.0
    %2104 = vmatpush1.msra.mxu0 0.0
    %2105 = vmatprep.subr.mxu0 0.0
    %2106 = vmatpush1.msra.mxu0 0.0
    %2107 = vmatprep.subr.mxu0 0.0
    %2108 = vmatpush1.msra.mxu0 0.0
    %2109 = vmatprep.subr.mxu0 0.0
    %2110 = vmatpush1.msra.mxu0 0.0
    %2111 = vmatprep.subr.mxu0 0.0
    %2112 = vmatpush1.msra.mxu0 0.0
    %2113 = vmatprep.subr.mxu0 0.0
    %2114 = vmatpush1.msra.mxu0 0.0
    %2115 = vmatprep.subr.mxu0 0.0
    %2116 = vmatpush1.msra.mxu0 0.0
    %2117 = vmatprep.subr.mxu0 0.0
    %2118 = vmatpush1.msra.mxu0 0.0
    %2119 = vmatprep.subr.mxu0 0.0
    %2120 = vmatpush1.msra.mxu0 0.0
    %2121 = vmatprep.subr.mxu0 0.0
    %2122 = vmatpush1.msra.mxu0 %v948
    %2123 = vmatprep.subr.mxu0 0.0
    %2124 = vmatpush2.msra.mxu0 0.0
    %2125 = vmatprep.subr.mxu0 0.0
    %2126 = vmatpush2.msra.mxu0 0.0
    %2127 = vmatprep.subr.mxu0 0.0
    %2128 = vmatpush2.msra.mxu0 0.0
    %2129 = vmatprep.subr.mxu0 0.0
    %2130 = vmatpush2.msra.mxu0 0.0
    %2131 = vmatprep.subr.mxu0 0.0
    %2132 = vmatpush2.msra.mxu0 0.0
    %2133 = vmatprep.subr.mxu0 0.0
    %2134 = vmatpush2.msra.mxu0 0.0
    %2135 = vmatprep.subr.mxu0 0.0
    %2136 = vmatpush2.msra.mxu0 0.0
    %2137 = vmatprep.subr.mxu0 0.0
    %2138 = vmatpush2.msra.mxu0 0.0
    %2139 = vmatprep.subr.mxu0 0.0
    %2140 = vmatpush2.msra.mxu0 0.0
    %2141 = vmatprep.subr.mxu0 0.0
    %2142 = vmatpush2.msra.mxu0 0.0
    %2143 = vmatprep.subr.mxu0 0.0
    %2144 = vmatpush2.msra.mxu0 0.0
    %2145 = vmatprep.subr.mxu0 0.0
    %2146 = vmatpush2.msra.mxu0 0.0
    %2147 = vmatprep.subr.mxu0 0.0
    %2148 = vmatpush2.msra.mxu0 0.0
    %2149 = vmatprep.subr.mxu0 0.0
    %2150 = vmatpush2.msra.mxu0 0.0
    %2151 = vmatprep.subr.mxu0 0.0
    %2152 = vmatpush2.msra.mxu0 0.0
    %2153 = vmatprep.subr.mxu0 0.0
    %2154 = vmatpush2.msra.mxu0 0.0
    %2155 = vmatprep.mubr.f32.mxu0 0.0
    %2156 = vmatmul.mubr.f32.gmra.mxu0 %v2089
    %v2157 = vpop.f32.mrf.mxu0
    %v2158 = vadd.f32 0.0, %v2157
    %v2159 = vpop.f32.mrf.mxu0
    %2160 = vdwg.mxu0
    %v2162 = vsel %vm1026, %v1721, 0
    %2164 = vmatprep.subr.mxu0 0.0
    %2165 = vmatpush1.msra.mxu0 0.0
    %2166 = vmatprep.subr.mxu0 0.0
    %2167 = vmatpush1.msra.mxu0 0.0
    %2168 = vmatprep.subr.mxu0 0.0
    %2169 = vmatpush1.msra.mxu0 0.0
    %2170 = vmatprep.subr.mxu0 0.0
    %2171 = vmatpush1.msra.mxu0 0.0
    %2172 = vmatprep.subr.mxu0 0.0
    %2173 = vmatpush1.msra.mxu0 0.0
    %2174 = vmatprep.subr.mxu0 0.0
    %2175 = vmatpush1.msra.mxu0 0.0
    %2176 = vmatprep.subr.mxu0 0.0
    %2177 = vmatpush1.msra.mxu0 0.0
    %2178 = vmatprep.subr.mxu0 0.0
    %2179 = vmatpush1.msra.mxu0 0.0
    %2180 = vmatprep.subr.mxu0 0.0
    %2181 = vmatpush1.msra.mxu0 0.0
    %2182 = vmatprep.subr.mxu0 0.0
    %2183 = vmatpush1.msra.mxu0 0.0
    %2184 = vmatprep.subr.mxu0 0.0
    %2185 = vmatpush1.msra.mxu0 0.0
    %2186 = vmatprep.subr.mxu0 0.0
    %2187 = vmatpush1.msra.mxu0 0.0
    %2188 = vmatprep.subr.mxu0 0.0
    %2189 = vmatpush1.msra.mxu0 0.0
    %2190 = vmatprep.subr.mxu0 0.0
    %2191 = vmatpush1.msra.mxu0 0.0
    %2192 = vmatprep.subr.mxu0 0.0
    %2193 = vmatpush1.msra.mxu0 0.0
    %2194 = vmatprep.subr.mxu0 0.0
    %2195 = vmatpush1.msra.mxu0 %v1018
    %2196 = vmatprep.subr.mxu0 0.0
    %2197 = vmatpush2.msra.mxu0 0.0
    %2198 = vmatprep.subr.mxu0 0.0
    %2199 = vmatpush2.msra.mxu0 0.0
    %2200 = vmatprep.subr.mxu0 0.0
    %2201 = vmatpush2.msra.mxu0 0.0
    %2202 = vmatprep.subr.mxu0 0.0
    %2203 = vmatpush2.msra.mxu0 0.0
    %2204 = vmatprep.subr.mxu0 0.0
    %2205 = vmatpush2.msra.mxu0 0.0
    %2206 = vmatprep.subr.mxu0 0.0
    %2207 = vmatpush2.msra.mxu0 0.0
    %2208 = vmatprep.subr.mxu0 0.0
    %2209 = vmatpush2.msra.mxu0 0.0
    %2210 = vmatprep.subr.mxu0 0.0
    %2211 = vmatpush2.msra.mxu0 0.0
    %2212 = vmatprep.subr.mxu0 0.0
    %2213 = vmatpush2.msra.mxu0 0.0
    %2214 = vmatprep.subr.mxu0 0.0
    %2215 = vmatpush2.msra.mxu0 0.0
    %2216 = vmatprep.subr.mxu0 0.0
    %2217 = vmatpush2.msra.mxu0 0.0
    %2218 = vmatprep.subr.mxu0 0.0
    %2219 = vmatpush2.msra.mxu0 0.0
    %2220 = vmatprep.subr.mxu0 0.0
    %2221 = vmatpush2.msra.mxu0 0.0
    %2222 = vmatprep.subr.mxu0 0.0
    %2223 = vmatpush2.msra.mxu0 0.0
    %2224 = vmatprep.subr.mxu0 0.0
    %2225 = vmatpush2.msra.mxu0 0.0
    %2226 = vmatprep.subr.mxu0 0.0
    %2227 = vmatpush2.msra.mxu0 0.0
    %2228 = vmatprep.mubr.f32.mxu0 0.0
    %2229 = vmatmul.mubr.f32.gmra.mxu0 %v2162
    %v2230 = vpop.f32.mrf.mxu0
    %v2231 = vadd.f32 0.0, %v2230
    %v2232 = vpop.f32.mrf.mxu0
    %2233 = vdwg.mxu0
    %v2235 = vsel %vm1026, %v1722, 0
    %2237 = vmatprep.subr.mxu0 0.0
    %2238 = vmatpush1.msra.mxu0 0.0
    %2239 = vmatprep.subr.mxu0 0.0
    %2240 = vmatpush1.msra.mxu0 0.0
    %2241 = vmatprep.subr.mxu0 0.0
    %2242 = vmatpush1.msra.mxu0 0.0
    %2243 = vmatprep.subr.mxu0 0.0
    %2244 = vmatpush1.msra.mxu0 0.0
    %2245 = vmatprep.subr.mxu0 0.0
    %2246 = vmatpush1.msra.mxu0 0.0
    %2247 = vmatprep.subr.mxu0 0.0
    %2248 = vmatpush1.msra.mxu0 0.0
    %2249 = vmatprep.subr.mxu0 0.0
    %2250 = vmatpush1.msra.mxu0 0.0
    %2251 = vmatprep.subr.mxu0 0.0
    %2252 = vmatpush1.msra.mxu0 0.0
    %2253 = vmatprep.subr.mxu0 0.0
    %2254 = vmatpush1.msra.mxu0 0.0
    %2255 = vmatprep.subr.mxu0 0.0
    %2256 = vmatpush1.msra.mxu0 0.0
    %2257 = vmatprep.subr.mxu0 0.0
    %2258 = vmatpush1.msra.mxu0 0.0
    %2259 = vmatprep.subr.mxu0 0.0
    %2260 = vmatpush1.msra.mxu0 0.0
    %2261 = vmatprep.subr.mxu0 0.0
    %2262 = vmatpush1.msra.mxu0 0.0
    %2263 = vmatprep.subr.mxu0 0.0
    %2264 = vmatpush1.msra.mxu0 0.0
    %2265 = vmatprep.subr.mxu0 0.0
    %2266 = vmatpush1.msra.mxu0 0.0
    %2267 = vmatprep.subr.mxu0 0.0
    %2268 = vmatpush1.msra.mxu0 %v1023
    %2269 = vmatprep.subr.mxu0 0.0
    %2270 = vmatpush2.msra.mxu0 0.0
    %2271 = vmatprep.subr.mxu0 0.0
    %2272 = vmatpush2.msra.mxu0 0.0
    %2273 = vmatprep.subr.mxu0 0.0
    %2274 = vmatpush2.msra.mxu0 0.0
    %2275 = vmatprep.subr.mxu0 0.0
    %2276 = vmatpush2.msra.mxu0 0.0
    %2277 = vmatprep.subr.mxu0 0.0
    %2278 = vmatpush2.msra.mxu0 0.0
    %2279 = vmatprep.subr.mxu0 0.0
    %2280 = vmatpush2.msra.mxu0 0.0
    %2281 = vmatprep.subr.mxu0 0.0
    %2282 = vmatpush2.msra.mxu0 0.0
    %2283 = vmatprep.subr.mxu0 0.0
    %2284 = vmatpush2.msra.mxu0 0.0
    %2285 = vmatprep.subr.mxu0 0.0
    %2286 = vmatpush2.msra.mxu0 0.0
    %2287 = vmatprep.subr.mxu0 0.0
    %2288 = vmatpush2.msra.mxu0 0.0
    %2289 = vmatprep.subr.mxu0 0.0
    %2290 = vmatpush2.msra.mxu0 0.0
    %2291 = vmatprep.subr.mxu0 0.0
    %2292 = vmatpush2.msra.mxu0 0.0
    %2293 = vmatprep.subr.mxu0 0.0
    %2294 = vmatpush2.msra.mxu0 0.0
    %2295 = vmatprep.subr.mxu0 0.0
    %2296 = vmatpush2.msra.mxu0 0.0
    %2297 = vmatprep.subr.mxu0 0.0
    %2298 = vmatpush2.msra.mxu0 0.0
    %2299 = vmatprep.subr.mxu0 0.0
    %2300 = vmatpush2.msra.mxu0 0.0
    %2301 = vmatprep.mubr.f32.mxu0 0.0
    %2302 = vmatmul.mubr.f32.gmra.mxu0 %v2235
    %v2303 = vpop.f32.mrf.mxu0
    %v2304 = vadd.f32 0.0, %v2303
    %v2305 = vpop.f32.mrf.mxu0
    %2306 = vdwg.mxu0
    %s2307 = scalar_lea.vmem %s3, 384
    %v2308 = vld [vmem:[%s2307] sm:$0xff]
    %v2309 = vld [vmem:[%s2307 + $0x8] sm:$0xff]
    %v2310 = vld [vmem:[%s2307 + $0x10] sm:$0xff]
    %v2311 = vld [vmem:[%s2307 + $0x18] sm:$0xff]
    %v2312 = vld [vmem:[%s2307 + $0x20] sm:$0xff]
    %v2313 = vld [vmem:[%s2307 + $0x28] sm:$0xff]
    %v2314 = vld [vmem:[%s2307 + $0x30] sm:$0xff]
    %v2315 = vld [vmem:[%s2307 + $0x38] sm:$0xff]
    %v2316 = vld [vmem:[%s2307 + $0x40] sm:$0xff]
    %v2317 = vld [vmem:[%s2307 + $0x48] sm:$0xff]
    %v2318 = vld [vmem:[%s2307 + $0x50] sm:$0xff]
    %v2319 = vld [vmem:[%s2307 + $0x58] sm:$0xff]
    %v2320 = vld [vmem:[%s2307 + $0x60] sm:$0xff]
    %v2321 = vld [vmem:[%s2307 + $0x68] sm:$0xff]
    %v2322 = vld [vmem:[%s2307 + $0x70] sm:$0xff]
    %v2323 = vld [vmem:[%s2307 + $0x78] sm:$0xff]
    %v2325 = vsel %vm1026, %v1793, 0
    %v2328 = vsel %vm1026, %v1866, 0
    %v2331 = vsel %vm1026, %v2308, 0
    %v2334 = vsel %vm1026, %v2309, 0
    %v2337 = vsel %vm1026, %v2310, 0
    %v2340 = vsel %vm1026, %v2311, 0
    %2342 = vmatprep.subr.mxu0 0.0
    %2343 = vmatpush1.xpose.msra.mxu0 0.0
    %2344 = vmatprep.subr.mxu0 0.0
    %2345 = vmatpush1.xpose.msra.mxu0 0.0
    %2346 = vmatprep.subr.mxu0 0.0
    %2347 = vmatpush1.xpose.msra.mxu0 0.0
    %2348 = vmatprep.subr.mxu0 0.0
    %2349 = vmatpush1.xpose.msra.mxu0 0.0
    %2350 = vmatprep.subr.mxu0 0.0
    %2351 = vmatpush1.xpose.msra.mxu0 0.0
    %2352 = vmatprep.subr.mxu0 0.0
    %2353 = vmatpush1.xpose.msra.mxu0 0.0
    %2354 = vmatprep.subr.mxu0 0.0
    %2355 = vmatpush1.xpose.msra.mxu0 0.0
    %2356 = vmatprep.subr.mxu0 0.0
    %2357 = vmatpush1.xpose.msra.mxu0 0.0
    %2358 = vmatprep.subr.mxu0 0.0
    %2359 = vmatpush1.xpose.msra.mxu0 0.0
    %2360 = vmatprep.subr.mxu0 0.0
    %2361 = vmatpush1.xpose.msra.mxu0 0.0
    %2362 = vmatprep.subr.mxu0 0.0
    %2363 = vmatpush1.xpose.msra.mxu0 0.0
    %2364 = vmatprep.subr.mxu0 0.0
    %2365 = vmatpush1.xpose.msra.mxu0 0.0
    %2366 = vmatprep.subr.mxu0 0.0
    %2367 = vmatpush1.xpose.msra.mxu0 %v2340
    %2368 = vmatprep.subr.mxu0 0.0
    %2369 = vmatpush1.xpose.msra.mxu0 %v2337
    %2370 = vmatprep.subr.mxu0 0.0
    %2371 = vmatpush1.xpose.msra.mxu0 %v2334
    %2372 = vmatprep.subr.mxu0 0.0
    %2373 = vmatpush1.xpose.msra.mxu0 %v2331
    %2374 = vmatprep.subr.mxu0 0.0
    %2375 = vmatpush2.xpose.msra.mxu0 0.0
    %2376 = vmatprep.subr.mxu0 0.0
    %2377 = vmatpush2.xpose.msra.mxu0 0.0
    %2378 = vmatprep.subr.mxu0 0.0
    %2379 = vmatpush2.xpose.msra.mxu0 0.0
    %2380 = vmatprep.subr.mxu0 0.0
    %2381 = vmatpush2.xpose.msra.mxu0 0.0
    %2382 = vmatprep.subr.mxu0 0.0
    %2383 = vmatpush2.xpose.msra.mxu0 0.0
    %2384 = vmatprep.subr.mxu0 0.0
    %2385 = vmatpush2.xpose.msra.mxu0 0.0
    %2386 = vmatprep.subr.mxu0 0.0
    %2387 = vmatpush2.xpose.msra.mxu0 0.0
    %2388 = vmatprep.subr.mxu0 0.0
    %2389 = vmatpush2.xpose.msra.mxu0 0.0
    %2390 = vmatprep.subr.mxu0 0.0
    %2391 = vmatpush2.xpose.msra.mxu0 0.0
    %2392 = vmatprep.subr.mxu0 0.0
    %2393 = vmatpush2.xpose.msra.mxu0 0.0
    %2394 = vmatprep.subr.mxu0 0.0
    %2395 = vmatpush2.xpose.msra.mxu0 0.0
    %2396 = vmatprep.subr.mxu0 0.0
    %2397 = vmatpush2.xpose.msra.mxu0 0.0
    %2398 = vmatprep.subr.mxu0 0.0
    %2399 = vmatpush2.xpose.msra.mxu0 0.0
    %2400 = vmatprep.subr.mxu0 0.0
    %2401 = vmatpush2.xpose.msra.mxu0 0.0
    %2402 = vmatprep.subr.mxu0 0.0
    %2403 = vmatpush2.xpose.msra.mxu0 0.0
    %2404 = vmatprep.subr.mxu0 0.0
    %2405 = vmatpush2.xpose.msra.mxu0 0.0
    %2406 = vmatprep.mubr.f32.mxu0 0.0
    %2407 = vmatmul.mubr.f32.gmra.mxu0 %v2325
    %v2408 = vpop.f32.mrf.mxu0
    %v2409 = vadd.f32 0.0, %v2408
    %v2410 = vpop.f32.mrf.mxu0
    %2411 = vmatprep.mubr.f32.mxu0 0.0
    %2412 = vmatmul.mubr.f32.gmra.mxu0 %v2328
    %v2413 = vpop.f32.mrf.mxu0
    %v2414 = vadd.f32 0.0, %v2413
    %v2415 = vpop.f32.mrf.mxu0
    %2416 = vdwg.mxu0
    %v2418 = vsel %vm1026, %v1939, 0
    %v2421 = vsel %vm1026, %v2012, 0
    %v2424 = vsel %vm1026, %v2312, 0
    %v2427 = vsel %vm1026, %v2313, 0
    %v2430 = vsel %vm1026, %v2314, 0
    %v2433 = vsel %vm1026, %v2315, 0
    %2435 = vmatprep.subr.mxu0 0.0
    %2436 = vmatpush1.xpose.msra.mxu0 0.0
    %2437 = vmatprep.subr.mxu0 0.0
    %2438 = vmatpush1.xpose.msra.mxu0 0.0
    %2439 = vmatprep.subr.mxu0 0.0
    %2440 = vmatpush1.xpose.msra.mxu0 0.0
    %2441 = vmatprep.subr.mxu0 0.0
    %2442 = vmatpush1.xpose.msra.mxu0 0.0
    %2443 = vmatprep.subr.mxu0 0.0
    %2444 = vmatpush1.xpose.msra.mxu0 0.0
    %2445 = vmatprep.subr.mxu0 0.0
    %2446 = vmatpush1.xpose.msra.mxu0 0.0
    %2447 = vmatprep.subr.mxu0 0.0
    %2448 = vmatpush1.xpose.msra.mxu0 0.0
    %2449 = vmatprep.subr.mxu0 0.0
    %2450 = vmatpush1.xpose.msra.mxu0 0.0
    %2451 = vmatprep.subr.mxu0 0.0
    %2452 = vmatpush1.xpose.msra.mxu0 0.0
    %2453 = vmatprep.subr.mxu0 0.0
    %2454 = vmatpush1.xpose.msra.mxu0 0.0
    %2455 = vmatprep.subr.mxu0 0.0
    %2456 = vmatpush1.xpose.msra.mxu0 0.0
    %2457 = vmatprep.subr.mxu0 0.0
    %2458 = vmatpush1.xpose.msra.mxu0 0.0
    %2459 = vmatprep.subr.mxu0 0.0
    %2460 = vmatpush1.xpose.msra.mxu0 %v2433
    %2461 = vmatprep.subr.mxu0 0.0
    %2462 = vmatpush1.xpose.msra.mxu0 %v2430
    %2463 = vmatprep.subr.mxu0 0.0
    %2464 = vmatpush1.xpose.msra.mxu0 %v2427
    %2465 = vmatprep.subr.mxu0 0.0
    %2466 = vmatpush1.xpose.msra.mxu0 %v2424
    %2467 = vmatprep.subr.mxu0 0.0
    %2468 = vmatpush2.xpose.msra.mxu0 0.0
    %2469 = vmatprep.subr.mxu0 0.0
    %2470 = vmatpush2.xpose.msra.mxu0 0.0
    %2471 = vmatprep.subr.mxu0 0.0
    %2472 = vmatpush2.xpose.msra.mxu0 0.0
    %2473 = vmatprep.subr.mxu0 0.0
    %2474 = vmatpush2.xpose.msra.mxu0 0.0
    %2475 = vmatprep.subr.mxu0 0.0
    %2476 = vmatpush2.xpose.msra.mxu0 0.0
    %2477 = vmatprep.subr.mxu0 0.0
    %2478 = vmatpush2.xpose.msra.mxu0 0.0
    %2479 = vmatprep.subr.mxu0 0.0
    %2480 = vmatpush2.xpose.msra.mxu0 0.0
    %2481 = vmatprep.subr.mxu0 0.0
    %2482 = vmatpush2.xpose.msra.mxu0 0.0
    %2483 = vmatprep.subr.mxu0 0.0
    %2484 = vmatpush2.xpose.msra.mxu0 0.0
    %2485 = vmatprep.subr.mxu0 0.0
    %2486 = vmatpush2.xpose.msra.mxu0 0.0
    %2487 = vmatprep.subr.mxu0 0.0
    %2488 = vmatpush2.xpose.msra.mxu0 0.0
    %2489 = vmatprep.subr.mxu0 0.0
    %2490 = vmatpush2.xpose.msra.mxu0 0.0
    %2491 = vmatprep.subr.mxu0 0.0
    %2492 = vmatpush2.xpose.msra.mxu0 0.0
    %2493 = vmatprep.subr.mxu0 0.0
    %2494 = vmatpush2.xpose.msra.mxu0 0.0
    %2495 = vmatprep.subr.mxu0 0.0
    %2496 = vmatpush2.xpose.msra.mxu0 0.0
    %2497 = vmatprep.subr.mxu0 0.0
    %2498 = vmatpush2.xpose.msra.mxu0 0.0
    %2499 = vmatprep.mubr.f32.mxu0 0.0
    %2500 = vmatmul.mubr.f32.gmra.mxu0 %v2418
    %v2501 = vpop.f32.mrf.mxu0
    %v2502 = vadd.f32 0.0, %v2501
    %v2503 = vpop.f32.mrf.mxu0
    %2504 = vmatprep.mubr.f32.mxu0 0.0
    %2505 = vmatmul.mubr.f32.gmra.mxu0 %v2421
    %v2506 = vpop.f32.mrf.mxu0
    %v2507 = vadd.f32 0.0, %v2506
    %v2508 = vpop.f32.mrf.mxu0
    %2509 = vdwg.mxu0
    %v2511 = vsel %vm1026, %v2085, 0
    %v2514 = vsel %vm1026, %v2158, 0
    %v2517 = vsel %vm1026, %v2316, 0
    %v2520 = vsel %vm1026, %v2317, 0
    %v2523 = vsel %vm1026, %v2318, 0
    %v2526 = vsel %vm1026, %v2319, 0
    %2528 = vmatprep.subr.mxu0 0.0
    %2529 = vmatpush1.xpose.msra.mxu0 0.0
    %2530 = vmatprep.subr.mxu0 0.0
    %2531 = vmatpush1.xpose.msra.mxu0 0.0
    %2532 = vmatprep.subr.mxu0 0.0
    %2533 = vmatpush1.xpose.msra.mxu0 0.0
    %2534 = vmatprep.subr.mxu0 0.0
    %2535 = vmatpush1.xpose.msra.mxu0 0.0
    %2536 = vmatprep.subr.mxu0 0.0
    %2537 = vmatpush1.xpose.msra.mxu0 0.0
    %2538 = vmatprep.subr.mxu0 0.0
    %2539 = vmatpush1.xpose.msra.mxu0 0.0
    %2540 = vmatprep.subr.mxu0 0.0
    %2541 = vmatpush1.xpose.msra.mxu0 0.0
    %2542 = vmatprep.subr.mxu0 0.0
    %2543 = vmatpush1.xpose.msra.mxu0 0.0
    %2544 = vmatprep.subr.mxu0 0.0
    %2545 = vmatpush1.xpose.msra.mxu0 0.0
    %2546 = vmatprep.subr.mxu0 0.0
    %2547 = vmatpush1.xpose.msra.mxu0 0.0
    %2548 = vmatprep.subr.mxu0 0.0
    %2549 = vmatpush1.xpose.msra.mxu0 0.0
    %2550 = vmatprep.subr.mxu0 0.0
    %2551 = vmatpush1.xpose.msra.mxu0 0.0
    %2552 = vmatprep.subr.mxu0 0.0
    %2553 = vmatpush1.xpose.msra.mxu0 %v2526
    %2554 = vmatprep.subr.mxu0 0.0
    %2555 = vmatpush1.xpose.msra.mxu0 %v2523
    %2556 = vmatprep.subr.mxu0 0.0
    %2557 = vmatpush1.xpose.msra.mxu0 %v2520
    %2558 = vmatprep.subr.mxu0 0.0
    %2559 = vmatpush1.xpose.msra.mxu0 %v2517
    %2560 = vmatprep.subr.mxu0 0.0
    %2561 = vmatpush2.xpose.msra.mxu0 0.0
    %2562 = vmatprep.subr.mxu0 0.0
    %2563 = vmatpush2.xpose.msra.mxu0 0.0
    %2564 = vmatprep.subr.mxu0 0.0
    %2565 = vmatpush2.xpose.msra.mxu0 0.0
    %2566 = vmatprep.subr.mxu0 0.0
    %2567 = vmatpush2.xpose.msra.mxu0 0.0
    %2568 = vmatprep.subr.mxu0 0.0
    %2569 = vmatpush2.xpose.msra.mxu0 0.0
    %2570 = vmatprep.subr.mxu0 0.0
    %2571 = vmatpush2.xpose.msra.mxu0 0.0
    %2572 = vmatprep.subr.mxu0 0.0
    %2573 = vmatpush2.xpose.msra.mxu0 0.0
    %2574 = vmatprep.subr.mxu0 0.0
    %2575 = vmatpush2.xpose.msra.mxu0 0.0
    %2576 = vmatprep.subr.mxu0 0.0
    %2577 = vmatpush2.xpose.msra.mxu0 0.0
    %2578 = vmatprep.subr.mxu0 0.0
    %2579 = vmatpush2.xpose.msra.mxu0 0.0
    %2580 = vmatprep.subr.mxu0 0.0
    %2581 = vmatpush2.xpose.msra.mxu0 0.0
    %2582 = vmatprep.subr.mxu0 0.0
    %2583 = vmatpush2.xpose.msra.mxu0 0.0
    %2584 = vmatprep.subr.mxu0 0.0
    %2585 = vmatpush2.xpose.msra.mxu0 0.0
    %2586 = vmatprep.subr.mxu0 0.0
    %2587 = vmatpush2.xpose.msra.mxu0 0.0
    %2588 = vmatprep.subr.mxu0 0.0
    %2589 = vmatpush2.xpose.msra.mxu0 0.0
    %2590 = vmatprep.subr.mxu0 0.0
    %2591 = vmatpush2.xpose.msra.mxu0 0.0
    %2592 = vmatprep.mubr.f32.mxu0 0.0
    %2593 = vmatmul.mubr.f32.gmra.mxu0 %v2511
    %v2594 = vpop.f32.mrf.mxu0
    %v2595 = vadd.f32 0.0, %v2594
    %v2596 = vpop.f32.mrf.mxu0
    %2597 = vmatprep.mubr.f32.mxu0 0.0
    %2598 = vmatmul.mubr.f32.gmra.mxu0 %v2514
    %v2599 = vpop.f32.mrf.mxu0
    %v2600 = vadd.f32 0.0, %v2599
    %v2601 = vpop.f32.mrf.mxu0
    %2602 = vdwg.mxu0
    %v2604 = vsel %vm1026, %v2231, 0
    %v2607 = vsel %vm1026, %v2304, 0
    %v2610 = vsel %vm1026, %v2320, 0
    %v2613 = vsel %vm1026, %v2321, 0
    %v2616 = vsel %vm1026, %v2322, 0
    %v2619 = vsel %vm1026, %v2323, 0
    %2621 = vmatprep.subr.mxu0 0.0
    %2622 = vmatpush1.xpose.msra.mxu0 0.0
    %2623 = vmatprep.subr.mxu0 0.0
    %2624 = vmatpush1.xpose.msra.mxu0 0.0
    %2625 = vmatprep.subr.mxu0 0.0
    %2626 = vmatpush1.xpose.msra.mxu0 0.0
    %2627 = vmatprep.subr.mxu0 0.0
    %2628 = vmatpush1.xpose.msra.mxu0 0.0
    %2629 = vmatprep.subr.mxu0 0.0
    %2630 = vmatpush1.xpose.msra.mxu0 0.0
    %2631 = vmatprep.subr.mxu0 0.0
    %2632 = vmatpush1.xpose.msra.mxu0 0.0
    %2633 = vmatprep.subr.mxu0 0.0
    %2634 = vmatpush1.xpose.msra.mxu0 0.0
    %2635 = vmatprep.subr.mxu0 0.0
    %2636 = vmatpush1.xpose.msra.mxu0 0.0
    %2637 = vmatprep.subr.mxu0 0.0
    %2638 = vmatpush1.xpose.msra.mxu0 0.0
    %2639 = vmatprep.subr.mxu0 0.0
    %2640 = vmatpush1.xpose.msra.mxu0 0.0
    %2641 = vmatprep.subr.mxu0 0.0
    %2642 = vmatpush1.xpose.msra.mxu0 0.0
    %2643 = vmatprep.subr.mxu0 0.0
    %2644 = vmatpush1.xpose.msra.mxu0 0.0
    %2645 = vmatprep.subr.mxu0 0.0
    %2646 = vmatpush1.xpose.msra.mxu0 %v2619
    %2647 = vmatprep.subr.mxu0 0.0
    %2648 = vmatpush1.xpose.msra.mxu0 %v2616
    %2649 = vmatprep.subr.mxu0 0.0
    %2650 = vmatpush1.xpose.msra.mxu0 %v2613
    %2651 = vmatprep.subr.mxu0 0.0
    %2652 = vmatpush1.xpose.msra.mxu0 %v2610
    %2653 = vmatprep.subr.mxu0 0.0
    %2654 = vmatpush2.xpose.msra.mxu0 0.0
    %2655 = vmatprep.subr.mxu0 0.0
    %2656 = vmatpush2.xpose.msra.mxu0 0.0
    %2657 = vmatprep.subr.mxu0 0.0
    %2658 = vmatpush2.xpose.msra.mxu0 0.0
    %2659 = vmatprep.subr.mxu0 0.0
    %2660 = vmatpush2.xpose.msra.mxu0 0.0
    %2661 = vmatprep.subr.mxu0 0.0
    %2662 = vmatpush2.xpose.msra.mxu0 0.0
    %2663 = vmatprep.subr.mxu0 0.0
    %2664 = vmatpush2.xpose.msra.mxu0 0.0
    %2665 = vmatprep.subr.mxu0 0.0
    %2666 = vmatpush2.xpose.msra.mxu0 0.0
    %2667 = vmatprep.subr.mxu0 0.0
    %2668 = vmatpush2.xpose.msra.mxu0 0.0
    %2669 = vmatprep.subr.mxu0 0.0
    %2670 = vmatpush2.xpose.msra.mxu0 0.0
    %2671 = vmatprep.subr.mxu0 0.0
    %2672 = vmatpush2.xpose.msra.mxu0 0.0
    %2673 = vmatprep.subr.mxu0 0.0
    %2674 = vmatpush2.xpose.msra.mxu0 0.0
    %2675 = vmatprep.subr.mxu0 0.0
    %2676 = vmatpush2.xpose.msra.mxu0 0.0
    %2677 = vmatprep.subr.mxu0 0.0
    %2678 = vmatpush2.xpose.msra.mxu0 0.0
    %2679 = vmatprep.subr.mxu0 0.0
    %2680 = vmatpush2.xpose.msra.mxu0 0.0
    %2681 = vmatprep.subr.mxu0 0.0
    %2682 = vmatpush2.xpose.msra.mxu0 0.0
    %2683 = vmatprep.subr.mxu0 0.0
    %2684 = vmatpush2.xpose.msra.mxu0 0.0
    %2685 = vmatprep.mubr.f32.mxu0 0.0
    %2686 = vmatmul.mubr.f32.gmra.mxu0 %v2604
    %v2687 = vpop.f32.mrf.mxu0
    %v2688 = vadd.f32 0.0, %v2687
    %v2689 = vpop.f32.mrf.mxu0
    %2690 = vmatprep.mubr.f32.mxu0 0.0
    %2691 = vmatmul.mubr.f32.gmra.mxu0 %v2607
    %v2692 = vpop.f32.mrf.mxu0
    %v2693 = vadd.f32 0.0, %v2692
    %v2694 = vpop.f32.mrf.mxu0
    %2695 = vdwg.mxu0
    %v2696 = vsel %vm30, %v2409, 0.0
    %v2697 = vsel %vm30, %v2502, 0.0
    %v2698 = vadd.f32 %v2696, %v2697
    %v2699 = vsel %vm30, %v2595, 0.0
    %v2700 = vadd.f32 %v2698, %v2699
    %v2701 = vsel %vm30, %v2688, 0.0
    %v2702 = vadd.f32 %v2700, %v2701
    %v2703 = vsel %vm30, %v2414, 0.0
    %v2704 = vsel %vm30, %v2507, 0.0
    %v2705 = vadd.f32 %v2703, %v2704
    %v2706 = vsel %vm30, %v2600, 0.0
    %v2707 = vadd.f32 %v2705, %v2706
    %v2708 = vsel %vm30, %v2693, 0.0
    %v2709 = vadd.f32 %v2707, %v2708
    %v2710 = vlaneseq
    %v2711 = vshrl.u32 %v2710, 7
    %v2712 = vsub.s32 0, %v2711
    %v2713 = vrot.slane %v25, %v2712
    %v2714 = vadd.f32 %v2702, %v2713
    %v2715 = vadd.f32 %v2709, %v2713
    %v2716 = vadd.f32 %v21, %v2714
    %v2717 = vadd.f32 %v22, %v2715
    %v2718 = vsel %vm30, %v2716, 0.0
    %2719 = vadd.xlane.f32.xlu0 %v2718
    %v2720 = vpop.xlane.xlu0 %2719
    %v2721 = vsel %vm30, %v2717, 0.0
    %2722 = vadd.xlane.f32.xlu0 %v2721
    %v2723 = vpop.xlane.xlu0 %2722
    %v2724 = vmul.f32 %v2720, %v37
    %v2725 = vmul.f32 %v2723, %v37
    %v2726 = vsub.f32 %v2716, %v2724
    %v2727 = vsub.f32 %v2717, %v2725
    %v2728 = vmul.f32 %v2726, %v2726
    %v2729 = vmul.f32 %v2727, %v2727
    %v2730 = vsel %vm30, %v2728, 0.0
    %2731 = vadd.xlane.f32.xlu0 %v2730
    %v2732 = vpop.xlane.xlu0 %2731
    %v2733 = vsel %vm30, %v2729, 0.0
    %2734 = vadd.xlane.f32.xlu0 %v2733
    %v2735 = vpop.xlane.xlu0 %2734
    %v2736 = vmul.f32 %v2732, %v37
    %v2737 = vmul.f32 %v2735, %v37
    %v2738 = vadd.f32 %v2736, 1e-05
    %v2739 = vadd.f32 %v2737, 1e-05
    %v2740 = vrsqrt.pop %v2738
    %v2741 = vrsqrt.pop %v2739
    %v2742 = vmul.f32 %v2726, %v2740
    %v2743 = vmul.f32 %v2727, %v2741
    %v2744 = vlaneseq
    %v2745 = vshrl.u32 %v2744, 7
    %v2746 = vsub.s32 0, %v2745
    %v2747 = vrot.slane %v26, %v2746
    %v2748 = vmul.f32 %v2742, %v2747
    %v2749 = vmul.f32 %v2743, %v2747
    %v2750 = vlaneseq
    %v2751 = vshrl.u32 %v2750, 7
    %v2752 = vsub.s32 0, %v2751
    %v2753 = vrot.slane %v27, %v2752
    %v2754 = vadd.f32 %v2748, %v2753
    %v2755 = vadd.f32 %v2749, %v2753
    %v2756 = vld [vmem:[%s4] sm:$0xff]
    %v2757 = vld [vmem:[%s4 + $0x8] sm:$0xff]
    %v2758 = vld [vmem:[%s4 + $0x10] sm:$0xff]
    %v2759 = vld [vmem:[%s4 + $0x18] sm:$0xff]
    %v2761 = vlaneseq
    %v2762 = vshrl.u32 %v2761, 7
    %v2763 = vsub.s32 0, %v2762
    %v2764 = vrot.slane %v29, %v2763
    %v2767 = vsel %vm30, %v2754, 0
    %v2770 = vsel %vm30, %v2755, 0
    %2772 = vmatprep.subr.mxu0 0.0
    %2773 = vmatpush1.msra.mxu0 0.0
    %2774 = vmatprep.subr.mxu0 0.0
    %2775 = vmatpush1.msra.mxu0 0.0
    %2776 = vmatprep.subr.mxu0 0.0
    %2777 = vmatpush1.msra.mxu0 0.0
    %2778 = vmatprep.subr.mxu0 0.0
    %2779 = vmatpush1.msra.mxu0 0.0
    %2780 = vmatprep.subr.mxu0 0.0
    %2781 = vmatpush1.msra.mxu0 0.0
    %2782 = vmatprep.subr.mxu0 0.0
    %2783 = vmatpush1.msra.mxu0 0.0
    %2784 = vmatprep.subr.mxu0 0.0
    %2785 = vmatpush1.msra.mxu0 0.0
    %2786 = vmatprep.subr.mxu0 0.0
    %2787 = vmatpush1.msra.mxu0 0.0
    %2788 = vmatprep.subr.mxu0 0.0
    %2789 = vmatpush1.msra.mxu0 0.0
    %2790 = vmatprep.subr.mxu0 0.0
    %2791 = vmatpush1.msra.mxu0 0.0
    %2792 = vmatprep.subr.mxu0 0.0
    %2793 = vmatpush1.msra.mxu0 0.0
    %2794 = vmatprep.subr.mxu0 0.0
    %2795 = vmatpush1.msra.mxu0 0.0
    %2796 = vmatprep.subr.mxu0 0.0
    %2797 = vmatpush1.msra.mxu0 %v2759
    %2798 = vmatprep.subr.mxu0 0.0
    %2799 = vmatpush1.msra.mxu0 %v2758
    %2800 = vmatprep.subr.mxu0 0.0
    %2801 = vmatpush1.msra.mxu0 %v2757
    %2802 = vmatprep.subr.mxu0 0.0
    %2803 = vmatpush1.msra.mxu0 %v2756
    %2804 = vmatprep.subr.mxu0 0.0
    %2805 = vmatpush2.msra.mxu0 0.0
    %2806 = vmatprep.subr.mxu0 0.0
    %2807 = vmatpush2.msra.mxu0 0.0
    %2808 = vmatprep.subr.mxu0 0.0
    %2809 = vmatpush2.msra.mxu0 0.0
    %2810 = vmatprep.subr.mxu0 0.0
    %2811 = vmatpush2.msra.mxu0 0.0
    %2812 = vmatprep.subr.mxu0 0.0
    %2813 = vmatpush2.msra.mxu0 0.0
    %2814 = vmatprep.subr.mxu0 0.0
    %2815 = vmatpush2.msra.mxu0 0.0
    %2816 = vmatprep.subr.mxu0 0.0
    %2817 = vmatpush2.msra.mxu0 0.0
    %2818 = vmatprep.subr.mxu0 0.0
    %2819 = vmatpush2.msra.mxu0 0.0
    %2820 = vmatprep.subr.mxu0 0.0
    %2821 = vmatpush2.msra.mxu0 0.0
    %2822 = vmatprep.subr.mxu0 0.0
    %2823 = vmatpush2.msra.mxu0 0.0
    %2824 = vmatprep.subr.mxu0 0.0
    %2825 = vmatpush2.msra.mxu0 0.0
    %2826 = vmatprep.subr.mxu0 0.0
    %2827 = vmatpush2.msra.mxu0 0.0
    %2828 = vmatprep.subr.mxu0 0.0
    %2829 = vmatpush2.msra.mxu0 0.0
    %2830 = vmatprep.subr.mxu0 0.0
    %2831 = vmatpush2.msra.mxu0 0.0
    %2832 = vmatprep.subr.mxu0 0.0
    %2833 = vmatpush2.msra.mxu0 0.0
    %2834 = vmatprep.subr.mxu0 0.0
    %2835 = vmatpush2.msra.mxu0 0.0
    %2836 = vmatprep.mubr.f32.mxu0 0.0
    %2837 = vmatmul.mubr.f32.gmra.mxu0 %v2767
    %v2838 = vpop.f32.mrf.mxu0
    %v2839 = vadd.f32 %v2764, %v2838
    %v2840 = vpop.f32.mrf.mxu0
    %2841 = vmatprep.mubr.f32.mxu0 0.0
    %2842 = vmatmul.mubr.f32.gmra.mxu0 %v2770
    %v2843 = vpop.f32.mrf.mxu0
    %v2844 = vadd.f32 %v2764, %v2843
    %v2845 = vpop.f32.mrf.mxu0
    %2846 = vdwg.mxu0
    %v2847 = vmul.f32 %v2839, %v2839
    %v2848 = vmul.f32 %v2844, %v2844
    %v2849 = vmul.f32 %v2839, %v2847
    %v2850 = vmul.f32 %v2844, %v2848
    %v2851 = vmul.f32 %v2849, 0.044715
    %v2852 = vmul.f32 %v2850, 0.044715
    %v2853 = vadd.f32 %v2839, %v2851
    %v2854 = vadd.f32 %v2844, %v2852
    %v2855 = vmul.f32 %v2853, 0.7978846
    %v2856 = vmul.f32 %v2854, 0.7978846
    %v2857 = vtanh.pop %v2855
    %v2858 = vtanh.pop %v2856
    %v2859 = vadd.f32 %v2857, 1.0
    %v2860 = vadd.f32 %v2858, 1.0
    %v2861 = vmul.f32 %v2859, 0.5
    %v2862 = vmul.f32 %v2860, 0.5
    %v2863 = vmul.f32 %v2839, %v2861
    %v2864 = vmul.f32 %v2844, %v2862
    %s2865 = scalar_lea.vmem %s4, 32
    %v2866 = vld [vmem:[%s2865] sm:$0xff]
    %v2867 = vld [vmem:[%s2865 + $0x8] sm:$0xff]
    %v2868 = vld [vmem:[%s2865 + $0x10] sm:$0xff]
    %v2869 = vld [vmem:[%s2865 + $0x18] sm:$0xff]
    %v2870 = vlaneseq
    %v2871 = vshrl.u32 %v2870, 7
    %v2872 = vsub.s32 0, %v2871
    %v2873 = vrot.slane %v28, %v2872
    %2874 = vmatprep.subr.mxu0 0.0
    %2875 = vmatpush1.xpose.msra.mxu0 0.0
    %2876 = vmatprep.subr.mxu0 0.0
    %2877 = vmatpush1.xpose.msra.mxu0 0.0
    %2878 = vmatprep.subr.mxu0 0.0
    %2879 = vmatpush1.xpose.msra.mxu0 0.0
    %2880 = vmatprep.subr.mxu0 0.0
    %2881 = vmatpush1.xpose.msra.mxu0 0.0
    %2882 = vmatprep.subr.mxu0 0.0
    %2883 = vmatpush1.xpose.msra.mxu0 0.0
    %2884 = vmatprep.subr.mxu0 0.0
    %2885 = vmatpush1.xpose.msra.mxu0 0.0
    %2886 = vmatprep.subr.mxu0 0.0
    %2887 = vmatpush1.xpose.msra.mxu0 0.0
    %2888 = vmatprep.subr.mxu0 0.0
    %2889 = vmatpush1.xpose.msra.mxu0 0.0
    %2890 = vmatprep.subr.mxu0 0.0
    %2891 = vmatpush1.xpose.msra.mxu0 0.0
    %2892 = vmatprep.subr.mxu0 0.0
    %2893 = vmatpush1.xpose.msra.mxu0 0.0
    %2894 = vmatprep.subr.mxu0 0.0
    %2895 = vmatpush1.xpose.msra.mxu0 0.0
    %2896 = vmatprep.subr.mxu0 0.0
    %2897 = vmatpush1.xpose.msra.mxu0 0.0
    %2898 = vmatprep.subr.mxu0 0.0
    %2899 = vmatpush1.xpose.msra.mxu0 %v2869
    %2900 = vmatprep.subr.mxu0 0.0
    %2901 = vmatpush1.xpose.msra.mxu0 %v2868
    %2902 = vmatprep.subr.mxu0 0.0
    %2903 = vmatpush1.xpose.msra.mxu0 %v2867
    %2904 = vmatprep.subr.mxu0 0.0
    %2905 = vmatpush1.xpose.msra.mxu0 %v2866
    %2906 = vmatprep.subr.mxu0 0.0
    %2907 = vmatpush2.xpose.msra.mxu0 0.0
    %2908 = vmatprep.subr.mxu0 0.0
    %2909 = vmatpush2.xpose.msra.mxu0 0.0
    %2910 = vmatprep.subr.mxu0 0.0
    %2911 = vmatpush2.xpose.msra.mxu0 0.0
    %2912 = vmatprep.subr.mxu0 0.0
    %2913 = vmatpush2.xpose.msra.mxu0 0.0
    %2914 = vmatprep.subr.mxu0 0.0
    %2915 = vmatpush2.xpose.msra.mxu0 0.0
    %2916 = vmatprep.subr.mxu0 0.0
    %2917 = vmatpush2.xpose.msra.mxu0 0.0
    %2918 = vmatprep.subr.mxu0 0.0
    %2919 = vmatpush2.xpose.msra.mxu0 0.0
    %2920 = vmatprep.subr.mxu0 0.0
    %2921 = vmatpush2.xpose.msra.mxu0 0.0
    %2922 = vmatprep.subr.mxu0 0.0
    %2923 = vmatpush2.xpose.msra.mxu0 0.0
    %2924 = vmatprep.subr.mxu0 0.0
    %2925 = vmatpush2.xpose.msra.mxu0 0.0
    %2926 = vmatprep.subr.mxu0 0.0
    %2927 = vmatpush2.xpose.msra.mxu0 0.0
    %2928 = vmatprep.subr.mxu0 0.0
    %2929 = vmatpush2.xpose.msra.mxu0 0.0
    %2930 = vmatprep.subr.mxu0 0.0
    %2931 = vmatpush2.xpose.msra.mxu0 0.0
    %2932 = vmatprep.subr.mxu0 0.0
    %2933 = vmatpush2.xpose.msra.mxu0 0.0
    %2934 = vmatprep.subr.mxu0 0.0
    %2935 = vmatpush2.xpose.msra.mxu0 0.0
    %2936 = vmatprep.subr.mxu0 0.0
    %2937 = vmatpush2.xpose.msra.mxu0 0.0
    %2938 = vmatprep.mubr.f32.mxu0 0.0
    %2939 = vmatmul.mubr.f32.gmra.mxu0 %v2863
    %v2940 = vpop.f32.mrf.mxu0
    %v2941 = vadd.f32 %v2873, %v2940
    %v2942 = vpop.f32.mrf.mxu0
    %2943 = vmatprep.mubr.f32.mxu0 0.0
    %2944 = vmatmul.mubr.f32.gmra.mxu0 %v2864
    %v2945 = vpop.f32.mrf.mxu0
    %v2946 = vadd.f32 %v2873, %v2945
    %v2947 = vpop.f32.mrf.mxu0
    %2948 = vdwg.mxu0
    %v2949 = vadd.f32 %v2716, %v2941
    %v2950 = vadd.f32 %v2717, %v2946
    %2951 = vst.msk [vmem:[#allocation2] sm:$0xff] %vm30, %v2949
    %2952 = vst.msk [vmem:[#allocation2 + $0x8] sm:$0xff] %vm30, %v2950
    // Predicated region
    $region22: #{tpu_custom_call.1} parent=1 // pred_check
      _
    $region23: #{tpu_custom_call.1} parent=1 // pred_check_branch
      %2954 = sbr.rel (0) target = $region25
    $region24: #{tpu_custom_call.1} parent=1 // pred_region
      %s2956 = ssub.s32 256, 256
      %2957 = vsyncadd [#allocation3], %s2956
      %s2958 = sshll.u32 [#allocation2], 4
      %s2959 = int_to_ptr.vmem [resolvable:$true] %s2958
      %2964 = dma.vmem_to_hbm [thread:$0]  %s2959, 256, %s5, [#allocation3], 128, 128, 8
    $region25: #{tpu_custom_call.1} parent=1 // pred_fallthru
      _
    // Predicated region
    $region26: #{tpu_custom_call.1} parent=1 // pred_check
      _
    $region27: #{tpu_custom_call.1} parent=1 // pred_check_branch
      %2966 = sbr.rel (0) target = $region29
    $region28: #{tpu_custom_call.1} parent=1 // pred_region
      %2967 = dma.done [#allocation3], 256
    $region29: #{tpu_custom_call.1} parent=1 // pred_fallthru
      _
    %2968 = vsyncpa [#allocation3], 1

</llo_original>
